<compile_context>
chip_gen: v6e
topology: v6e:2x2x1
jax: 0.10.0
libtpu: 0.0.40
codegen_flags: <defaults>
</compile_context>

<pallas_src>
import jax
import jax.numpy as jnp
import numpy as np
from jax import lax
from jax.experimental import pallas as pl
from jax.experimental.pallas import tpu as pltpu


# ----------------------------- Pallas kernel --------------------------------


def decoder_kernel(x_ref, h0_ref, wih_ref, whh_ref, bgx_ref, bhhn_ref,
                   wlin_ref, blin_ref,
                   y_ref, hn_ref,
                   gx_scr, hseq_scr):
    """Single invocation (no grid); whole problem lives in VMEM.

    x_ref    : (T*B, E)  embedded tokens, flat time-major (row = t*B + b), pre-ReLU
    h0_ref   : (B, H)    initial hidden state
    wih_ref  : (E, 3H)   GRU input weights, gate order [r, z, n] (transposed)
    whh_ref  : (H, 3H)   GRU hidden weights (transposed)
    bgx_ref  : (1, 3H)   b_ih with b_hh pre-folded into the r/z slots
    bhhn_ref : (1, H)    b_hh for the n gate (applied inside r * (...))
    wlin_ref : (H, V)    output projection (transposed)
    blin_ref : (1, V)
    y_ref    : (B, T, V) log-softmax output, batch-first
    hn_ref   : (B, H)    final hidden state
    gx_scr   : (T*B, 3H) VMEM scratch: precomputed input-gate pre-activations
    hseq_scr : (B*T, H)  VMEM scratch: hidden states, flat batch-major (row = b*T + t)
    """
    TB, E = x_ref.shape
    B, H = h0_ref.shape
    T = TB // B

    # ---- Phase 1: time-parallel input projection (one big matmul, M = T*B) ----
    x = jnp.maximum(x_ref[...], 0.0)                     # ReLU on the embeddings
    gx_scr[...] = (jnp.dot(x, wih_ref[...],
                           preferred_element_type=jnp.float32) + bgx_ref[...])

    # ---- Phase 2: sequential GRU recurrence (only h @ W_hh^T on the chain) ----
    w_hh = whh_ref[...]
    b_hh_n = bhhn_ref[...]
    h = h0_ref[...]                                      # (B, H), f32
    for t in range(T):                                   # static, fully unrolled
        g = gx_scr[t * B:(t + 1) * B, :]                 # (B, 3H) precomputed
        gh = jnp.dot(h, w_hh, preferred_element_type=jnp.float32)  # (B, 3H)
        # PyTorch GRU gate order: [reset, update, new].
        r = jax.nn.sigmoid(g[:, 0:H] + gh[:, 0:H])
        z = jax.nn.sigmoid(g[:, H:2 * H] + gh[:, H:2 * H])
        n = jnp.tanh(g[:, 2 * H:3 * H] + r * (gh[:, 2 * H:3 * H] + b_hh_n))
        h = (1.0 - z) * n + z * h                        # (B, H)
        # Scatter h_t into batch-major scratch so phase 3 can both run one big
        # matmul and write the batch-first output with plain leading-dim stores.
        for b in range(B):
            row = b * T + t
            hseq_scr[row:row + 1, :] = h[b:b + 1, :]
    hn_ref[...] = h                                      # final hidden, written once

    # ---- Phase 3: time-parallel output projection + log-softmax (M = B*T) ----
    logits = (jnp.dot(hseq_scr[...], wlin_ref[...],
                      preferred_element_type=jnp.float32) + blin_ref[...])   # (B*T, V)
    m = jnp.max(logits, axis=-1, keepdims=True)
    shifted = logits - m
    logp = shifted - jnp.log(jnp.sum(jnp.exp(shifted), axis=-1, keepdims=True))
    for b in range(B):                                   # batch-first write, no transpose
        y_ref[b] = logp[b * T:(b + 1) * T, :]            # (T, V)


# ------------------------------ wrapper --------------------------------------


def decoder_forward(tokens, prev_hidden, params):
    """tokens: (B, T) int32, prev_hidden: (1, B, H). Returns (y, hidden) like the
    PyTorch module: y (B, T, V) log-probs, hidden (1, B, H)."""
    B, T = tokens.shape
    V, E = params["embedding"].shape
    H = params["w_hh"].shape[1]

    # Embedding lookup (glue gather), emitted directly in flat time-major order
    # (row = t*B + b) -> no HBM transpose of the embedded sequence.
    idx = jnp.reshape(jnp.transpose(tokens), (-1,))                  # (T*B,)
    x_flat = jnp.take(params["embedding"], idx, axis=0).astype(jnp.float32)

    h0 = prev_hidden[0].astype(jnp.float32)                          # (B, H)

    w_ih_t = jnp.transpose(params["w_ih"]).astype(jnp.float32)       # (E, 3H)
    w_hh_t = jnp.transpose(params["w_hh"]).astype(jnp.float32)       # (H, 3H)
    w_lin_t = jnp.transpose(params["w_lin"]).astype(jnp.float32)     # (H, V)

    b_ih = params["b_ih"]
    b_hh = params["b_hh"]
    # Pre-fold b_ih + b_hh for the r/z gates; keep b_hh_n separate for the n gate.
    b_gx = jnp.concatenate([b_ih[:2 * H] + b_hh[:2 * H], b_ih[2 * H:]])[None, :]  # (1, 3H)
    b_hh_n = b_hh[2 * H:][None, :]                                   # (1, H)
    b_lin = params["b_lin"][None, :]                                 # (1, V)

    y, h_last = pl.pallas_call(
        decoder_kernel,
        out_shape=(
            jax.ShapeDtypeStruct((B, T, V), jnp.float32),   # log-probs, batch-first
            jax.ShapeDtypeStruct((B, H), jnp.float32),      # final hidden state
        ),
        scratch_shapes=[
            pltpu.VMEM((T * B, 3 * H), jnp.float32),        # input-gate pre-activations
            pltpu.VMEM((B * T, H), jnp.float32),            # hidden states, batch-major
        ],
    )(x_flat, h0, w_ih_t, w_hh_t, b_gx, b_hh_n, w_lin_t, b_lin)

    return y, h_last[None, :, :]


# --------------------------- pure-JAX reference -------------------------------


def decoder_reference(tokens, prev_hidden, p):
    emb = jnp.take(p["embedding"], tokens, axis=0)
    x = jnp.maximum(emb, 0.0)
    H = prev_hidden.shape[-1]

    def step(h, x_t):
        gx = x_t @ p["w_ih"].T + p["b_ih"]
        gh = h @ p["w_hh"].T + p["b_hh"]
        r = jax.nn.sigmoid(gx[:, :H] + gh[:, :H])
        z = jax.nn.sigmoid(gx[:, H:2 * H] + gh[:, H:2 * H])
        n = jnp.tanh(gx[:, 2 * H:] + r * gh[:, 2 * H:])
        h_new = (1.0 - z) * n + z * h
        return h_new, h_new

    h_last, outs = lax.scan(step, prev_hidden[0], jnp.transpose(x, (1, 0, 2)))
    outs = jnp.transpose(outs, (1, 0, 2))
    logits = outs @ p["w_lin"].T + p["b_lin"]
    y = jax.nn.log_softmax(logits, axis=-1)
    return y, h_last[None]


# --------------------------------- main ---------------------------------------


if __name__ == "__main__":
    # Small shapes consistent with the module (embed_size/hidden_size scaled down,
    # H and V kept lane-aligned at 128 for clean gate slicing / dense stores).
    B, T = 2, 8
    V = 128           # output_size (vocab)
    E = 32            # embed_size
    H = 128           # hidden_size

    key = jax.random.PRNGKey(0)
    keys = jax.random.split(key, 9)
    scale = 0.1
    params = {
        "embedding": scale * jax.random.normal(keys[0], (V, E), jnp.float32),
        "w_ih": scale * jax.random.normal(keys[1], (3 * H, E), jnp.float32),
        "w_hh": scale * jax.random.normal(keys[2], (3 * H, H), jnp.float32),
        "b_ih": scale * jax.random.normal(keys[3], (3 * H,), jnp.float32),
        "b_hh": scale * jax.random.normal(keys[4], (3 * H,), jnp.float32),
        "w_lin": scale * jax.random.normal(keys[5], (V, H), jnp.float32),
        "b_lin": scale * jax.random.normal(keys[6], (V,), jnp.float32),
    }
    tokens = jax.random.randint(keys[7], (B, T), 0, V, dtype=jnp.int32)
    prev_hidden = scale * jax.random.normal(keys[8], (1, B, H), jnp.float32)

    y, hidden = decoder_forward(tokens, prev_hidden, params)
    y = jax.block_until_ready(y)
    hidden = jax.block_until_ready(hidden)

    y_ref, hidden_ref = decoder_reference(tokens, prev_hidden, params)

    assert y.shape == (B, T, V) and hidden.shape == (1, B, H)
    np.testing.assert_allclose(np.asarray(y), np.asarray(y_ref), atol=1e-4, rtol=1e-4)
    np.testing.assert_allclose(np.asarray(hidden), np.asarray(hidden_ref), atol=1e-4, rtol=1e-4)

    print("KERNEL_OK")
</pallas_src>

<mosaic_0001>
module attributes {stable_mosaic.version = 11 : i64} {
  func.func @decoder_kernel(%arg0: memref<16x32xf32, #tpu.memory_space<vmem>>, %arg1: memref<2x128xf32, #tpu.memory_space<vmem>>, %arg2: memref<32x384xf32, #tpu.memory_space<vmem>>, %arg3: memref<128x384xf32, #tpu.memory_space<vmem>>, %arg4: memref<1x384xf32, #tpu.memory_space<vmem>>, %arg5: memref<1x128xf32, #tpu.memory_space<vmem>>, %arg6: memref<128x128xf32, #tpu.memory_space<vmem>>, %arg7: memref<1x128xf32, #tpu.memory_space<vmem>>, %arg8: memref<2x8x128xf32, #tpu.memory_space<vmem>>, %arg9: memref<2x128xf32, #tpu.memory_space<vmem>>, %arg10: memref<16x384xf32, #tpu.memory_space<vmem>>, %arg11: memref<16x128xf32, #tpu.memory_space<vmem>>) attributes {dimension_semantics = [], scalar_prefetch = 0 : i64, scratch_operands = 2 : i64, tpu.core_type = #tpu.core_type<tc>} {
    %c0 = arith.constant 0 : index
    %c0_0 = arith.constant 0 : index
    %0 = vector.load %arg0[%c0, %c0_0] : memref<16x32xf32, #tpu.memory_space<vmem>>, vector<16x32xf32>
    %cst = arith.constant 0.000000e+00 : f32
    %1 = vector.broadcast %cst : f32 to vector<16x32xf32>
    %2 = arith.maximumf %0, %1 : vector<16x32xf32>
    %c0_1 = arith.constant 0 : index
    %c0_2 = arith.constant 0 : index
    %3 = vector.load %arg2[%c0_1, %c0_2] : memref<32x384xf32, #tpu.memory_space<vmem>>, vector<32x384xf32>
    %cst_3 = arith.constant dense<0.000000e+00> : vector<16x384xf32>
    %4 = tpu.matmul %2, %3, %cst_3 {dimension_numbers = #tpu.dot_dimension_numbers<[1], [0], [0], [1], [0, 0, 1, 1], [], []>} : vector<16x32xf32>, vector<32x384xf32>, vector<16x384xf32> -> vector<16x384xf32>
    %c0_4 = arith.constant 0 : index
    %c0_5 = arith.constant 0 : index
    %5 = vector.load %arg4[%c0_4, %c0_5] : memref<1x384xf32, #tpu.memory_space<vmem>>, vector<1x384xf32>
    %6 = vector.broadcast %5 : vector<1x384xf32> to vector<16x384xf32>
    %7 = arith.addf %4, %6 : vector<16x384xf32>
    %c0_6 = arith.constant 0 : index
    %c0_7 = arith.constant 0 : index
    %8 = vector.load %arg10[%c0_6, %c0_7] : memref<16x384xf32, #tpu.memory_space<vmem>>, vector<16x384xf32>
    tpu.vector_store %arg10[%c0_6, %c0_7], %7 {strides = array<i32>} : memref<16x384xf32, #tpu.memory_space<vmem>>, vector<16x384xf32>,
    %c0_8 = arith.constant 0 : index
    %c0_9 = arith.constant 0 : index
    %9 = vector.load %arg3[%c0_8, %c0_9] : memref<128x384xf32, #tpu.memory_space<vmem>>, vector<128x384xf32>
    %c0_10 = arith.constant 0 : index
    %c0_11 = arith.constant 0 : index
    %10 = vector.load %arg5[%c0_10, %c0_11] : memref<1x128xf32, #tpu.memory_space<vmem>>, vector<1x128xf32>
    %c0_12 = arith.constant 0 : index
    %c0_13 = arith.constant 0 : index
    %11 = vector.load %arg1[%c0_12, %c0_13] : memref<2x128xf32, #tpu.memory_space<vmem>>, vector<2x128xf32>
    %c0_14 = arith.constant 0 : index
    %c0_15 = arith.constant 0 : index
    %12 = vector.load %arg10[%c0_14, %c0_15] : memref<16x384xf32, #tpu.memory_space<vmem>>, vector<2x384xf32>
    %cst_16 = arith.constant dense<0.000000e+00> : vector<2x384xf32>
    %13 = tpu.matmul %11, %9, %cst_16 {dimension_numbers = #tpu.dot_dimension_numbers<[1], [0], [0], [1], [0, 0, 1, 1], [], []>} : vector<2x128xf32>, vector<128x384xf32>, vector<2x384xf32> -> vector<2x384xf32>
    %14 = vector.extract_strided_slice %12 {offsets = [0, 0], sizes = [2, 128], strides = [1, 1]} : vector<2x384xf32> to vector<2x128xf32>
    %15 = vector.extract_strided_slice %13 {offsets = [0, 0], sizes = [2, 128], strides = [1, 1]} : vector<2x384xf32> to vector<2x128xf32>
    %16 = arith.addf %14, %15 : vector<2x128xf32>
    %17 = arith.negf %16 : vector<2x128xf32>
    %18 = math.exp %17 : vector<2x128xf32>
    %cst_17 = arith.constant 1.000000e+00 : f32
    %19 = vector.broadcast %cst_17 : f32 to vector<2x128xf32>
    %20 = arith.addf %19, %18 : vector<2x128xf32>
    %21 = arith.divf %19, %20 : vector<2x128xf32>
    %22 = vector.extract_strided_slice %12 {offsets = [0, 128], sizes = [2, 128], strides = [1, 1]} : vector<2x384xf32> to vector<2x128xf32>
    %23 = vector.extract_strided_slice %13 {offsets = [0, 128], sizes = [2, 128], strides = [1, 1]} : vector<2x384xf32> to vector<2x128xf32>
    %24 = arith.addf %22, %23 : vector<2x128xf32>
    %25 = arith.negf %24 : vector<2x128xf32>
    %26 = math.exp %25 : vector<2x128xf32>
    %cst_18 = arith.constant 1.000000e+00 : f32
    %27 = vector.broadcast %cst_18 : f32 to vector<2x128xf32>
    %28 = arith.addf %27, %26 : vector<2x128xf32>
    %29 = arith.divf %27, %28 : vector<2x128xf32>
    %30 = vector.extract_strided_slice %12 {offsets = [0, 256], sizes = [2, 128], strides = [1, 1]} : vector<2x384xf32> to vector<2x128xf32>
    %31 = vector.extract_strided_slice %13 {offsets = [0, 256], sizes = [2, 128], strides = [1, 1]} : vector<2x384xf32> to vector<2x128xf32>
    %32 = vector.broadcast %10 : vector<1x128xf32> to vector<2x128xf32>
    %33 = arith.addf %31, %32 : vector<2x128xf32>
    %34 = arith.mulf %21, %33 : vector<2x128xf32>
    %35 = arith.addf %30, %34 : vector<2x128xf32>
    %36 = math.tanh %35 : vector<2x128xf32>
    %cst_19 = arith.constant 1.000000e+00 : f32
    %37 = vector.broadcast %cst_19 : f32 to vector<2x128xf32>
    %38 = arith.subf %37, %29 : vector<2x128xf32>
    %39 = arith.mulf %38, %36 : vector<2x128xf32>
    %40 = arith.mulf %29, %11 : vector<2x128xf32>
    %41 = arith.addf %39, %40 : vector<2x128xf32>
    %42 = vector.extract_strided_slice %41 {offsets = [0, 0], sizes = [1, 128], strides = [1, 1]} : vector<2x128xf32> to vector<1x128xf32>
    %c0_20 = arith.constant 0 : index
    %c0_21 = arith.constant 0 : index
    %43 = vector.load %arg11[%c0_20, %c0_21] : memref<16x128xf32, #tpu.memory_space<vmem>>, vector<1x128xf32>
    tpu.vector_store %arg11[%c0_20, %c0_21], %42 {strides = array<i32>} : memref<16x128xf32, #tpu.memory_space<vmem>>, vector<1x128xf32>,
    %44 = vector.extract_strided_slice %41 {offsets = [1, 0], sizes = [1, 128], strides = [1, 1]} : vector<2x128xf32> to vector<1x128xf32>
    %c8 = arith.constant 8 : index
    %c0_22 = arith.constant 0 : index
    %45 = vector.load %arg11[%c8, %c0_22] : memref<16x128xf32, #tpu.memory_space<vmem>>, vector<1x128xf32>
    tpu.vector_store %arg11[%c8, %c0_22], %44 {strides = array<i32>} : memref<16x128xf32, #tpu.memory_space<vmem>>, vector<1x128xf32>,
    %c2 = arith.constant 2 : index
    %c0_23 = arith.constant 0 : index
    %46 = vector.load %arg10[%c2, %c0_23] : memref<16x384xf32, #tpu.memory_space<vmem>>, vector<2x384xf32>
    %cst_24 = arith.constant dense<0.000000e+00> : vector<2x384xf32>
    %47 = tpu.matmul %41, %9, %cst_24 {dimension_numbers = #tpu.dot_dimension_numbers<[1], [0], [0], [1], [0, 0, 1, 1], [], []>} : vector<2x128xf32>, vector<128x384xf32>, vector<2x384xf32> -> vector<2x384xf32>
    %48 = vector.extract_strided_slice %46 {offsets = [0, 0], sizes = [2, 128], strides = [1, 1]} : vector<2x384xf32> to vector<2x128xf32>
    %49 = vector.extract_strided_slice %47 {offsets = [0, 0], sizes = [2, 128], strides = [1, 1]} : vector<2x384xf32> to vector<2x128xf32>
    %50 = arith.addf %48, %49 : vector<2x128xf32>
    %51 = arith.negf %50 : vector<2x128xf32>
    %52 = math.exp %51 : vector<2x128xf32>
    %cst_25 = arith.constant 1.000000e+00 : f32
    %53 = vector.broadcast %cst_25 : f32 to vector<2x128xf32>
    %54 = arith.addf %53, %52 : vector<2x128xf32>
    %55 = arith.divf %53, %54 : vector<2x128xf32>
    %56 = vector.extract_strided_slice %46 {offsets = [0, 128], sizes = [2, 128], strides = [1, 1]} : vector<2x384xf32> to vector<2x128xf32>
    %57 = vector.extract_strided_slice %47 {offsets = [0, 128], sizes = [2, 128], strides = [1, 1]} : vector<2x384xf32> to vector<2x128xf32>
    %58 = arith.addf %56, %57 : vector<2x128xf32>
    %59 = arith.negf %58 : vector<2x128xf32>
    %60 = math.exp %59 : vector<2x128xf32>
    %cst_26 = arith.constant 1.000000e+00 : f32
    %61 = vector.broadcast %cst_26 : f32 to vector<2x128xf32>
    %62 = arith.addf %61, %60 : vector<2x128xf32>
    %63 = arith.divf %61, %62 : vector<2x128xf32>
    %64 = vector.extract_strided_slice %46 {offsets = [0, 256], sizes = [2, 128], strides = [1, 1]} : vector<2x384xf32> to vector<2x128xf32>
    %65 = vector.extract_strided_slice %47 {offsets = [0, 256], sizes = [2, 128], strides = [1, 1]} : vector<2x384xf32> to vector<2x128xf32>
    %66 = vector.broadcast %10 : vector<1x128xf32> to vector<2x128xf32>
    %67 = arith.addf %65, %66 : vector<2x128xf32>
    %68 = arith.mulf %55, %67 : vector<2x128xf32>
    %69 = arith.addf %64, %68 : vector<2x128xf32>
    %70 = math.tanh %69 : vector<2x128xf32>
    %cst_27 = arith.constant 1.000000e+00 : f32
    %71 = vector.broadcast %cst_27 : f32 to vector<2x128xf32>
    %72 = arith.subf %71, %63 : vector<2x128xf32>
    %73 = arith.mulf %72, %70 : vector<2x128xf32>
    %74 = arith.mulf %63, %41 : vector<2x128xf32>
    %75 = arith.addf %73, %74 : vector<2x128xf32>
    %76 = vector.extract_strided_slice %75 {offsets = [0, 0], sizes = [1, 128], strides = [1, 1]} : vector<2x128xf32> to vector<1x128xf32>
    %c1 = arith.constant 1 : index
    %c0_28 = arith.constant 0 : index
    %77 = vector.load %arg11[%c1, %c0_28] : memref<16x128xf32, #tpu.memory_space<vmem>>, vector<1x128xf32>
    tpu.vector_store %arg11[%c1, %c0_28], %76 {strides = array<i32>} : memref<16x128xf32, #tpu.memory_space<vmem>>, vector<1x128xf32>,
    %78 = vector.extract_strided_slice %75 {offsets = [1, 0], sizes = [1, 128], strides = [1, 1]} : vector<2x128xf32> to vector<1x128xf32>
    %c9 = arith.constant 9 : index
    %c0_29 = arith.constant 0 : index
    %79 = vector.load %arg11[%c9, %c0_29] : memref<16x128xf32, #tpu.memory_space<vmem>>, vector<1x128xf32>
    tpu.vector_store %arg11[%c9, %c0_29], %78 {strides = array<i32>} : memref<16x128xf32, #tpu.memory_space<vmem>>, vector<1x128xf32>,
    %c4 = arith.constant 4 : index
    %c0_30 = arith.constant 0 : index
    %80 = vector.load %arg10[%c4, %c0_30] : memref<16x384xf32, #tpu.memory_space<vmem>>, vector<2x384xf32>
    %cst_31 = arith.constant dense<0.000000e+00> : vector<2x384xf32>
    %81 = tpu.matmul %75, %9, %cst_31 {dimension_numbers = #tpu.dot_dimension_numbers<[1], [0], [0], [1], [0, 0, 1, 1], [], []>} : vector<2x128xf32>, vector<128x384xf32>, vector<2x384xf32> -> vector<2x384xf32>
    %82 = vector.extract_strided_slice %80 {offsets = [0, 0], sizes = [2, 128], strides = [1, 1]} : vector<2x384xf32> to vector<2x128xf32>
    %83 = vector.extract_strided_slice %81 {offsets = [0, 0], sizes = [2, 128], strides = [1, 1]} : vector<2x384xf32> to vector<2x128xf32>
    %84 = arith.addf %82, %83 : vector<2x128xf32>
    %85 = arith.negf %84 : vector<2x128xf32>
    %86 = math.exp %85 : vector<2x128xf32>
    %cst_32 = arith.constant 1.000000e+00 : f32
    %87 = vector.broadcast %cst_32 : f32 to vector<2x128xf32>
    %88 = arith.addf %87, %86 : vector<2x128xf32>
    %89 = arith.divf %87, %88 : vector<2x128xf32>
    %90 = vector.extract_strided_slice %80 {offsets = [0, 128], sizes = [2, 128], strides = [1, 1]} : vector<2x384xf32> to vector<2x128xf32>
    %91 = vector.extract_strided_slice %81 {offsets = [0, 128], sizes = [2, 128], strides = [1, 1]} : vector<2x384xf32> to vector<2x128xf32>
    %92 = arith.addf %90, %91 : vector<2x128xf32>
    %93 = arith.negf %92 : vector<2x128xf32>
    %94 = math.exp %93 : vector<2x128xf32>
    %cst_33 = arith.constant 1.000000e+00 : f32
    %95 = vector.broadcast %cst_33 : f32 to vector<2x128xf32>
    %96 = arith.addf %95, %94 : vector<2x128xf32>
    %97 = arith.divf %95, %96 : vector<2x128xf32>
    %98 = vector.extract_strided_slice %80 {offsets = [0, 256], sizes = [2, 128], strides = [1, 1]} : vector<2x384xf32> to vector<2x128xf32>
    %99 = vector.extract_strided_slice %81 {offsets = [0, 256], sizes = [2, 128], strides = [1, 1]} : vector<2x384xf32> to vector<2x128xf32>
    %100 = vector.broadcast %10 : vector<1x128xf32> to vector<2x128xf32>
    %101 = arith.addf %99, %100 : vector<2x128xf32>
    %102 = arith.mulf %89, %101 : vector<2x128xf32>
    %103 = arith.addf %98, %102 : vector<2x128xf32>
    %104 = math.tanh %103 : vector<2x128xf32>
    %cst_34 = arith.constant 1.000000e+00 : f32
    %105 = vector.broadcast %cst_34 : f32 to vector<2x128xf32>
    %106 = arith.subf %105, %97 : vector<2x128xf32>
    %107 = arith.mulf %106, %104 : vector<2x128xf32>
    %108 = arith.mulf %97, %75 : vector<2x128xf32>
    %109 = arith.addf %107, %108 : vector<2x128xf32>
    %110 = vector.extract_strided_slice %109 {offsets = [0, 0], sizes = [1, 128], strides = [1, 1]} : vector<2x128xf32> to vector<1x128xf32>
    %c2_35 = arith.constant 2 : index
    %c0_36 = arith.constant 0 : index
    %111 = vector.load %arg11[%c2_35, %c0_36] : memref<16x128xf32, #tpu.memory_space<vmem>>, vector<1x128xf32>
    tpu.vector_store %arg11[%c2_35, %c0_36], %110 {strides = array<i32>} : memref<16x128xf32, #tpu.memory_space<vmem>>, vector<1x128xf32>,
    %112 = vector.extract_strided_slice %109 {offsets = [1, 0], sizes = [1, 128], strides = [1, 1]} : vector<2x128xf32> to vector<1x128xf32>
    %c10 = arith.constant 10 : index
    %c0_37 = arith.constant 0 : index
    %113 = vector.load %arg11[%c10, %c0_37] : memref<16x128xf32, #tpu.memory_space<vmem>>, vector<1x128xf32>
    tpu.vector_store %arg11[%c10, %c0_37], %112 {strides = array<i32>} : memref<16x128xf32, #tpu.memory_space<vmem>>, vector<1x128xf32>,
    %c6 = arith.constant 6 : index
    %c0_38 = arith.constant 0 : index
    %114 = vector.load %arg10[%c6, %c0_38] : memref<16x384xf32, #tpu.memory_space<vmem>>, vector<2x384xf32>
    %cst_39 = arith.constant dense<0.000000e+00> : vector<2x384xf32>
    %115 = tpu.matmul %109, %9, %cst_39 {dimension_numbers = #tpu.dot_dimension_numbers<[1], [0], [0], [1], [0, 0, 1, 1], [], []>} : vector<2x128xf32>, vector<128x384xf32>, vector<2x384xf32> -> vector<2x384xf32>
    %116 = vector.extract_strided_slice %114 {offsets = [0, 0], sizes = [2, 128], strides = [1, 1]} : vector<2x384xf32> to vector<2x128xf32>
    %117 = vector.extract_strided_slice %115 {offsets = [0, 0], sizes = [2, 128], strides = [1, 1]} : vector<2x384xf32> to vector<2x128xf32>
    %118 = arith.addf %116, %117 : vector<2x128xf32>
    %119 = arith.negf %118 : vector<2x128xf32>
    %120 = math.exp %119 : vector<2x128xf32>
    %cst_40 = arith.constant 1.000000e+00 : f32
    %121 = vector.broadcast %cst_40 : f32 to vector<2x128xf32>
    %122 = arith.addf %121, %120 : vector<2x128xf32>
    %123 = arith.divf %121, %122 : vector<2x128xf32>
    %124 = vector.extract_strided_slice %114 {offsets = [0, 128], sizes = [2, 128], strides = [1, 1]} : vector<2x384xf32> to vector<2x128xf32>
    %125 = vector.extract_strided_slice %115 {offsets = [0, 128], sizes = [2, 128], strides = [1, 1]} : vector<2x384xf32> to vector<2x128xf32>
    %126 = arith.addf %124, %125 : vector<2x128xf32>
    %127 = arith.negf %126 : vector<2x128xf32>
    %128 = math.exp %127 : vector<2x128xf32>
    %cst_41 = arith.constant 1.000000e+00 : f32
    %129 = vector.broadcast %cst_41 : f32 to vector<2x128xf32>
    %130 = arith.addf %129, %128 : vector<2x128xf32>
    %131 = arith.divf %129, %130 : vector<2x128xf32>
    %132 = vector.extract_strided_slice %114 {offsets = [0, 256], sizes = [2, 128], strides = [1, 1]} : vector<2x384xf32> to vector<2x128xf32>
    %133 = vector.extract_strided_slice %115 {offsets = [0, 256], sizes = [2, 128], strides = [1, 1]} : vector<2x384xf32> to vector<2x128xf32>
    %134 = vector.broadcast %10 : vector<1x128xf32> to vector<2x128xf32>
    %135 = arith.addf %133, %134 : vector<2x128xf32>
    %136 = arith.mulf %123, %135 : vector<2x128xf32>
    %137 = arith.addf %132, %136 : vector<2x128xf32>
    %138 = math.tanh %137 : vector<2x128xf32>
    %cst_42 = arith.constant 1.000000e+00 : f32
    %139 = vector.broadcast %cst_42 : f32 to vector<2x128xf32>
    %140 = arith.subf %139, %131 : vector<2x128xf32>
    %141 = arith.mulf %140, %138 : vector<2x128xf32>
    %142 = arith.mulf %131, %109 : vector<2x128xf32>
    %143 = arith.addf %141, %142 : vector<2x128xf32>
    %144 = vector.extract_strided_slice %143 {offsets = [0, 0], sizes = [1, 128], strides = [1, 1]} : vector<2x128xf32> to vector<1x128xf32>
    %c3 = arith.constant 3 : index
    %c0_43 = arith.constant 0 : index
    %145 = vector.load %arg11[%c3, %c0_43] : memref<16x128xf32, #tpu.memory_space<vmem>>, vector<1x128xf32>
    tpu.vector_store %arg11[%c3, %c0_43], %144 {strides = array<i32>} : memref<16x128xf32, #tpu.memory_space<vmem>>, vector<1x128xf32>,
    %146 = vector.extract_strided_slice %143 {offsets = [1, 0], sizes = [1, 128], strides = [1, 1]} : vector<2x128xf32> to vector<1x128xf32>
    %c11 = arith.constant 11 : index
    %c0_44 = arith.constant 0 : index
    %147 = vector.load %arg11[%c11, %c0_44] : memref<16x128xf32, #tpu.memory_space<vmem>>, vector<1x128xf32>
    tpu.vector_store %arg11[%c11, %c0_44], %146 {strides = array<i32>} : memref<16x128xf32, #tpu.memory_space<vmem>>, vector<1x128xf32>,
    %c8_45 = arith.constant 8 : index
    %c0_46 = arith.constant 0 : index
    %148 = vector.load %arg10[%c8_45, %c0_46] : memref<16x384xf32, #tpu.memory_space<vmem>>, vector<2x384xf32>
    %cst_47 = arith.constant dense<0.000000e+00> : vector<2x384xf32>
    %149 = tpu.matmul %143, %9, %cst_47 {dimension_numbers = #tpu.dot_dimension_numbers<[1], [0], [0], [1], [0, 0, 1, 1], [], []>} : vector<2x128xf32>, vector<128x384xf32>, vector<2x384xf32> -> vector<2x384xf32>
    %150 = vector.extract_strided_slice %148 {offsets = [0, 0], sizes = [2, 128], strides = [1, 1]} : vector<2x384xf32> to vector<2x128xf32>
    %151 = vector.extract_strided_slice %149 {offsets = [0, 0], sizes = [2, 128], strides = [1, 1]} : vector<2x384xf32> to vector<2x128xf32>
    %152 = arith.addf %150, %151 : vector<2x128xf32>
    %153 = arith.negf %152 : vector<2x128xf32>
    %154 = math.exp %153 : vector<2x128xf32>
    %cst_48 = arith.constant 1.000000e+00 : f32
    %155 = vector.broadcast %cst_48 : f32 to vector<2x128xf32>
    %156 = arith.addf %155, %154 : vector<2x128xf32>
    %157 = arith.divf %155, %156 : vector<2x128xf32>
    %158 = vector.extract_strided_slice %148 {offsets = [0, 128], sizes = [2, 128], strides = [1, 1]} : vector<2x384xf32> to vector<2x128xf32>
    %159 = vector.extract_strided_slice %149 {offsets = [0, 128], sizes = [2, 128], strides = [1, 1]} : vector<2x384xf32> to vector<2x128xf32>
    %160 = arith.addf %158, %159 : vector<2x128xf32>
    %161 = arith.negf %160 : vector<2x128xf32>
    %162 = math.exp %161 : vector<2x128xf32>
    %cst_49 = arith.constant 1.000000e+00 : f32
    %163 = vector.broadcast %cst_49 : f32 to vector<2x128xf32>
    %164 = arith.addf %163, %162 : vector<2x128xf32>
    %165 = arith.divf %163, %164 : vector<2x128xf32>
    %166 = vector.extract_strided_slice %148 {offsets = [0, 256], sizes = [2, 128], strides = [1, 1]} : vector<2x384xf32> to vector<2x128xf32>
    %167 = vector.extract_strided_slice %149 {offsets = [0, 256], sizes = [2, 128], strides = [1, 1]} : vector<2x384xf32> to vector<2x128xf32>
    %168 = vector.broadcast %10 : vector<1x128xf32> to vector<2x128xf32>
    %169 = arith.addf %167, %168 : vector<2x128xf32>
    %170 = arith.mulf %157, %169 : vector<2x128xf32>
    %171 = arith.addf %166, %170 : vector<2x128xf32>
    %172 = math.tanh %171 : vector<2x128xf32>
    %cst_50 = arith.constant 1.000000e+00 : f32
    %173 = vector.broadcast %cst_50 : f32 to vector<2x128xf32>
    %174 = arith.subf %173, %165 : vector<2x128xf32>
    %175 = arith.mulf %174, %172 : vector<2x128xf32>
    %176 = arith.mulf %165, %143 : vector<2x128xf32>
    %177 = arith.addf %175, %176 : vector<2x128xf32>
    %178 = vector.extract_strided_slice %177 {offsets = [0, 0], sizes = [1, 128], strides = [1, 1]} : vector<2x128xf32> to vector<1x128xf32>
    %c4_51 = arith.constant 4 : index
    %c0_52 = arith.constant 0 : index
    %179 = vector.load %arg11[%c4_51, %c0_52] : memref<16x128xf32, #tpu.memory_space<vmem>>, vector<1x128xf32>
    tpu.vector_store %arg11[%c4_51, %c0_52], %178 {strides = array<i32>} : memref<16x128xf32, #tpu.memory_space<vmem>>, vector<1x128xf32>,
    %180 = vector.extract_strided_slice %177 {offsets = [1, 0], sizes = [1, 128], strides = [1, 1]} : vector<2x128xf32> to vector<1x128xf32>
    %c12 = arith.constant 12 : index
    %c0_53 = arith.constant 0 : index
    %181 = vector.load %arg11[%c12, %c0_53] : memref<16x128xf32, #tpu.memory_space<vmem>>, vector<1x128xf32>
    tpu.vector_store %arg11[%c12, %c0_53], %180 {strides = array<i32>} : memref<16x128xf32, #tpu.memory_space<vmem>>, vector<1x128xf32>,
    %c10_54 = arith.constant 10 : index
    %c0_55 = arith.constant 0 : index
    %182 = vector.load %arg10[%c10_54, %c0_55] : memref<16x384xf32, #tpu.memory_space<vmem>>, vector<2x384xf32>
    %cst_56 = arith.constant dense<0.000000e+00> : vector<2x384xf32>
    %183 = tpu.matmul %177, %9, %cst_56 {dimension_numbers = #tpu.dot_dimension_numbers<[1], [0], [0], [1], [0, 0, 1, 1], [], []>} : vector<2x128xf32>, vector<128x384xf32>, vector<2x384xf32> -> vector<2x384xf32>
    %184 = vector.extract_strided_slice %182 {offsets = [0, 0], sizes = [2, 128], strides = [1, 1]} : vector<2x384xf32> to vector<2x128xf32>
    %185 = vector.extract_strided_slice %183 {offsets = [0, 0], sizes = [2, 128], strides = [1, 1]} : vector<2x384xf32> to vector<2x128xf32>
    %186 = arith.addf %184, %185 : vector<2x128xf32>
    %187 = arith.negf %186 : vector<2x128xf32>
    %188 = math.exp %187 : vector<2x128xf32>
    %cst_57 = arith.constant 1.000000e+00 : f32
    %189 = vector.broadcast %cst_57 : f32 to vector<2x128xf32>
    %190 = arith.addf %189, %188 : vector<2x128xf32>
    %191 = arith.divf %189, %190 : vector<2x128xf32>
    %192 = vector.extract_strided_slice %182 {offsets = [0, 128], sizes = [2, 128], strides = [1, 1]} : vector<2x384xf32> to vector<2x128xf32>
    %193 = vector.extract_strided_slice %183 {offsets = [0, 128], sizes = [2, 128], strides = [1, 1]} : vector<2x384xf32> to vector<2x128xf32>
    %194 = arith.addf %192, %193 : vector<2x128xf32>
    %195 = arith.negf %194 : vector<2x128xf32>
    %196 = math.exp %195 : vector<2x128xf32>
    %cst_58 = arith.constant 1.000000e+00 : f32
    %197 = vector.broadcast %cst_58 : f32 to vector<2x128xf32>
    %198 = arith.addf %197, %196 : vector<2x128xf32>
    %199 = arith.divf %197, %198 : vector<2x128xf32>
    %200 = vector.extract_strided_slice %182 {offsets = [0, 256], sizes = [2, 128], strides = [1, 1]} : vector<2x384xf32> to vector<2x128xf32>
    %201 = vector.extract_strided_slice %183 {offsets = [0, 256], sizes = [2, 128], strides = [1, 1]} : vector<2x384xf32> to vector<2x128xf32>
    %202 = vector.broadcast %10 : vector<1x128xf32> to vector<2x128xf32>
    %203 = arith.addf %201, %202 : vector<2x128xf32>
    %204 = arith.mulf %191, %203 : vector<2x128xf32>
    %205 = arith.addf %200, %204 : vector<2x128xf32>
    %206 = math.tanh %205 : vector<2x128xf32>
    %cst_59 = arith.constant 1.000000e+00 : f32
    %207 = vector.broadcast %cst_59 : f32 to vector<2x128xf32>
    %208 = arith.subf %207, %199 : vector<2x128xf32>
    %209 = arith.mulf %208, %206 : vector<2x128xf32>
    %210 = arith.mulf %199, %177 : vector<2x128xf32>
    %211 = arith.addf %209, %210 : vector<2x128xf32>
    %212 = vector.extract_strided_slice %211 {offsets = [0, 0], sizes = [1, 128], strides = [1, 1]} : vector<2x128xf32> to vector<1x128xf32>
    %c5 = arith.constant 5 : index
    %c0_60 = arith.constant 0 : index
    %213 = vector.load %arg11[%c5, %c0_60] : memref<16x128xf32, #tpu.memory_space<vmem>>, vector<1x128xf32>
    tpu.vector_store %arg11[%c5, %c0_60], %212 {strides = array<i32>} : memref<16x128xf32, #tpu.memory_space<vmem>>, vector<1x128xf32>,
    %214 = vector.extract_strided_slice %211 {offsets = [1, 0], sizes = [1, 128], strides = [1, 1]} : vector<2x128xf32> to vector<1x128xf32>
    %c13 = arith.constant 13 : index
    %c0_61 = arith.constant 0 : index
    %215 = vector.load %arg11[%c13, %c0_61] : memref<16x128xf32, #tpu.memory_space<vmem>>, vector<1x128xf32>
    tpu.vector_store %arg11[%c13, %c0_61], %214 {strides = array<i32>} : memref<16x128xf32, #tpu.memory_space<vmem>>, vector<1x128xf32>,
    %c12_62 = arith.constant 12 : index
    %c0_63 = arith.constant 0 : index
    %216 = vector.load %arg10[%c12_62, %c0_63] : memref<16x384xf32, #tpu.memory_space<vmem>>, vector<2x384xf32>
    %cst_64 = arith.constant dense<0.000000e+00> : vector<2x384xf32>
    %217 = tpu.matmul %211, %9, %cst_64 {dimension_numbers = #tpu.dot_dimension_numbers<[1], [0], [0], [1], [0, 0, 1, 1], [], []>} : vector<2x128xf32>, vector<128x384xf32>, vector<2x384xf32> -> vector<2x384xf32>
    %218 = vector.extract_strided_slice %216 {offsets = [0, 0], sizes = [2, 128], strides = [1, 1]} : vector<2x384xf32> to vector<2x128xf32>
    %219 = vector.extract_strided_slice %217 {offsets = [0, 0], sizes = [2, 128], strides = [1, 1]} : vector<2x384xf32> to vector<2x128xf32>
    %220 = arith.addf %218, %219 : vector<2x128xf32>
    %221 = arith.negf %220 : vector<2x128xf32>
    %222 = math.exp %221 : vector<2x128xf32>
    %cst_65 = arith.constant 1.000000e+00 : f32
    %223 = vector.broadcast %cst_65 : f32 to vector<2x128xf32>
    %224 = arith.addf %223, %222 : vector<2x128xf32>
    %225 = arith.divf %223, %224 : vector<2x128xf32>
    %226 = vector.extract_strided_slice %216 {offsets = [0, 128], sizes = [2, 128], strides = [1, 1]} : vector<2x384xf32> to vector<2x128xf32>
    %227 = vector.extract_strided_slice %217 {offsets = [0, 128], sizes = [2, 128], strides = [1, 1]} : vector<2x384xf32> to vector<2x128xf32>
    %228 = arith.addf %226, %227 : vector<2x128xf32>
    %229 = arith.negf %228 : vector<2x128xf32>
    %230 = math.exp %229 : vector<2x128xf32>
    %cst_66 = arith.constant 1.000000e+00 : f32
    %231 = vector.broadcast %cst_66 : f32 to vector<2x128xf32>
    %232 = arith.addf %231, %230 : vector<2x128xf32>
    %233 = arith.divf %231, %232 : vector<2x128xf32>
    %234 = vector.extract_strided_slice %216 {offsets = [0, 256], sizes = [2, 128], strides = [1, 1]} : vector<2x384xf32> to vector<2x128xf32>
    %235 = vector.extract_strided_slice %217 {offsets = [0, 256], sizes = [2, 128], strides = [1, 1]} : vector<2x384xf32> to vector<2x128xf32>
    %236 = vector.broadcast %10 : vector<1x128xf32> to vector<2x128xf32>
    %237 = arith.addf %235, %236 : vector<2x128xf32>
    %238 = arith.mulf %225, %237 : vector<2x128xf32>
    %239 = arith.addf %234, %238 : vector<2x128xf32>
    %240 = math.tanh %239 : vector<2x128xf32>
    %cst_67 = arith.constant 1.000000e+00 : f32
    %241 = vector.broadcast %cst_67 : f32 to vector<2x128xf32>
    %242 = arith.subf %241, %233 : vector<2x128xf32>
    %243 = arith.mulf %242, %240 : vector<2x128xf32>
    %244 = arith.mulf %233, %211 : vector<2x128xf32>
    %245 = arith.addf %243, %244 : vector<2x128xf32>
    %246 = vector.extract_strided_slice %245 {offsets = [0, 0], sizes = [1, 128], strides = [1, 1]} : vector<2x128xf32> to vector<1x128xf32>
    %c6_68 = arith.constant 6 : index
    %c0_69 = arith.constant 0 : index
    %247 = vector.load %arg11[%c6_68, %c0_69] : memref<16x128xf32, #tpu.memory_space<vmem>>, vector<1x128xf32>
    tpu.vector_store %arg11[%c6_68, %c0_69], %246 {strides = array<i32>} : memref<16x128xf32, #tpu.memory_space<vmem>>, vector<1x128xf32>,
    %248 = vector.extract_strided_slice %245 {offsets = [1, 0], sizes = [1, 128], strides = [1, 1]} : vector<2x128xf32> to vector<1x128xf32>
    %c14 = arith.constant 14 : index
    %c0_70 = arith.constant 0 : index
    %249 = vector.load %arg11[%c14, %c0_70] : memref<16x128xf32, #tpu.memory_space<vmem>>, vector<1x128xf32>
    tpu.vector_store %arg11[%c14, %c0_70], %248 {strides = array<i32>} : memref<16x128xf32, #tpu.memory_space<vmem>>, vector<1x128xf32>,
    %c14_71 = arith.constant 14 : index
    %c0_72 = arith.constant 0 : index
    %250 = vector.load %arg10[%c14_71, %c0_72] : memref<16x384xf32, #tpu.memory_space<vmem>>, vector<2x384xf32>
    %cst_73 = arith.constant dense<0.000000e+00> : vector<2x384xf32>
    %251 = tpu.matmul %245, %9, %cst_73 {dimension_numbers = #tpu.dot_dimension_numbers<[1], [0], [0], [1], [0, 0, 1, 1], [], []>} : vector<2x128xf32>, vector<128x384xf32>, vector<2x384xf32> -> vector<2x384xf32>
    %252 = vector.extract_strided_slice %250 {offsets = [0, 0], sizes = [2, 128], strides = [1, 1]} : vector<2x384xf32> to vector<2x128xf32>
    %253 = vector.extract_strided_slice %251 {offsets = [0, 0], sizes = [2, 128], strides = [1, 1]} : vector<2x384xf32> to vector<2x128xf32>
    %254 = arith.addf %252, %253 : vector<2x128xf32>
    %255 = arith.negf %254 : vector<2x128xf32>
    %256 = math.exp %255 : vector<2x128xf32>
    %cst_74 = arith.constant 1.000000e+00 : f32
    %257 = vector.broadcast %cst_74 : f32 to vector<2x128xf32>
    %258 = arith.addf %257, %256 : vector<2x128xf32>
    %259 = arith.divf %257, %258 : vector<2x128xf32>
    %260 = vector.extract_strided_slice %250 {offsets = [0, 128], sizes = [2, 128], strides = [1, 1]} : vector<2x384xf32> to vector<2x128xf32>
    %261 = vector.extract_strided_slice %251 {offsets = [0, 128], sizes = [2, 128], strides = [1, 1]} : vector<2x384xf32> to vector<2x128xf32>
    %262 = arith.addf %260, %261 : vector<2x128xf32>
    %263 = arith.negf %262 : vector<2x128xf32>
    %264 = math.exp %263 : vector<2x128xf32>
    %cst_75 = arith.constant 1.000000e+00 : f32
    %265 = vector.broadcast %cst_75 : f32 to vector<2x128xf32>
    %266 = arith.addf %265, %264 : vector<2x128xf32>
    %267 = arith.divf %265, %266 : vector<2x128xf32>
    %268 = vector.extract_strided_slice %250 {offsets = [0, 256], sizes = [2, 128], strides = [1, 1]} : vector<2x384xf32> to vector<2x128xf32>
    %269 = vector.extract_strided_slice %251 {offsets = [0, 256], sizes = [2, 128], strides = [1, 1]} : vector<2x384xf32> to vector<2x128xf32>
    %270 = vector.broadcast %10 : vector<1x128xf32> to vector<2x128xf32>
    %271 = arith.addf %269, %270 : vector<2x128xf32>
    %272 = arith.mulf %259, %271 : vector<2x128xf32>
    %273 = arith.addf %268, %272 : vector<2x128xf32>
    %274 = math.tanh %273 : vector<2x128xf32>
    %cst_76 = arith.constant 1.000000e+00 : f32
    %275 = vector.broadcast %cst_76 : f32 to vector<2x128xf32>
    %276 = arith.subf %275, %267 : vector<2x128xf32>
    %277 = arith.mulf %276, %274 : vector<2x128xf32>
    %278 = arith.mulf %267, %245 : vector<2x128xf32>
    %279 = arith.addf %277, %278 : vector<2x128xf32>
    %280 = vector.extract_strided_slice %279 {offsets = [0, 0], sizes = [1, 128], strides = [1, 1]} : vector<2x128xf32> to vector<1x128xf32>
    %c7 = arith.constant 7 : index
    %c0_77 = arith.constant 0 : index
    %281 = vector.load %arg11[%c7, %c0_77] : memref<16x128xf32, #tpu.memory_space<vmem>>, vector<1x128xf32>
    tpu.vector_store %arg11[%c7, %c0_77], %280 {strides = array<i32>} : memref<16x128xf32, #tpu.memory_space<vmem>>, vector<1x128xf32>,
    %282 = vector.extract_strided_slice %279 {offsets = [1, 0], sizes = [1, 128], strides = [1, 1]} : vector<2x128xf32> to vector<1x128xf32>
    %c15 = arith.constant 15 : index
    %c0_78 = arith.constant 0 : index
    %283 = vector.load %arg11[%c15, %c0_78] : memref<16x128xf32, #tpu.memory_space<vmem>>, vector<1x128xf32>
    tpu.vector_store %arg11[%c15, %c0_78], %282 {strides = array<i32>} : memref<16x128xf32, #tpu.memory_space<vmem>>, vector<1x128xf32>,
    %c0_79 = arith.constant 0 : index
    %c0_80 = arith.constant 0 : index
    %284 = vector.load %arg9[%c0_79, %c0_80] : memref<2x128xf32, #tpu.memory_space<vmem>>, vector<2x128xf32>
    tpu.vector_store %arg9[%c0_79, %c0_80], %279 {strides = array<i32>} : memref<2x128xf32, #tpu.memory_space<vmem>>, vector<2x128xf32>,
    %c0_81 = arith.constant 0 : index
    %c0_82 = arith.constant 0 : index
    %285 = vector.load %arg11[%c0_81, %c0_82] : memref<16x128xf32, #tpu.memory_space<vmem>>, vector<16x128xf32>
    %c0_83 = arith.constant 0 : index
    %c0_84 = arith.constant 0 : index
    %286 = vector.load %arg6[%c0_83, %c0_84] : memref<128x128xf32, #tpu.memory_space<vmem>>, vector<128x128xf32>
    %cst_85 = arith.constant dense<0.000000e+00> : vector<16x128xf32>
    %287 = tpu.matmul %285, %286, %cst_85 {dimension_numbers = #tpu.dot_dimension_numbers<[1], [0], [0], [1], [0, 0, 1, 1], [], []>} : vector<16x128xf32>, vector<128x128xf32>, vector<16x128xf32> -> vector<16x128xf32>
    %c0_86 = arith.constant 0 : index
    %c0_87 = arith.constant 0 : index
    %288 = vector.load %arg7[%c0_86, %c0_87] : memref<1x128xf32, #tpu.memory_space<vmem>>, vector<1x128xf32>
    %289 = vector.broadcast %288 : vector<1x128xf32> to vector<16x128xf32>
    %290 = arith.addf %287, %289 : vector<16x128xf32>
    %cst_88 = arith.constant dense<0xFF800000> : vector<16xf32>
    %291 = vector.multi_reduction <maximumf>, %290, %cst_88 [1] : vector<16x128xf32> to vector<16xf32>
    %292 = vector.shape_cast %291 : vector<16xf32> to vector<16x1xf32>
    %293 = vector.broadcast %292 : vector<16x1xf32> to vector<16x128xf32>
    %294 = arith.subf %290, %293 : vector<16x128xf32>
    %295 = math.exp %294 : vector<16x128xf32>
    %cst_89 = arith.constant dense<0.000000e+00> : vector<16xf32>
    %296 = vector.multi_reduction <add>, %295, %cst_89 [1] : vector<16x128xf32> to vector<16xf32>
    %297 = vector.shape_cast %296 : vector<16xf32> to vector<16x1xf32>
    %298 = math.log %297 : vector<16x1xf32>
    %299 = vector.broadcast %298 : vector<16x1xf32> to vector<16x128xf32>
    %300 = arith.subf %294, %299 : vector<16x128xf32>
    %301 = vector.extract_strided_slice %300 {offsets = [0, 0], sizes = [8, 128], strides = [1, 1]} : vector<16x128xf32> to vector<8x128xf32>
    %c0_90 = arith.constant 0 : index
    %c0_91 = arith.constant 0 : index
    %c0_92 = arith.constant 0 : index
    %302 = vector.load %arg8[%c0_90, %c0_91, %c0_92] : memref<2x8x128xf32, #tpu.memory_space<vmem>>, vector<1x8x128xf32>
    %303 = vector.shape_cast %302 : vector<1x8x128xf32> to vector<8x128xf32>
    %304 = vector.shape_cast %301 : vector<8x128xf32> to vector<1x8x128xf32>
    tpu.vector_store %arg8[%c0_90, %c0_91, %c0_92], %304 {strides = array<i32>} : memref<2x8x128xf32, #tpu.memory_space<vmem>>, vector<1x8x128xf32>,
    %305 = vector.extract_strided_slice %300 {offsets = [8, 0], sizes = [8, 128], strides = [1, 1]} : vector<16x128xf32> to vector<8x128xf32>
    %c1_93 = arith.constant 1 : index
    %c0_94 = arith.constant 0 : index
    %c0_95 = arith.constant 0 : index
    %306 = vector.load %arg8[%c1_93, %c0_94, %c0_95] : memref<2x8x128xf32, #tpu.memory_space<vmem>>, vector<1x8x128xf32>
    %307 = vector.shape_cast %306 : vector<1x8x128xf32> to vector<8x128xf32>
    %308 = vector.shape_cast %305 : vector<8x128xf32> to vector<1x8x128xf32>
    tpu.vector_store %arg8[%c1_93, %c0_94, %c0_95], %308 {strides = array<i32>} : memref<2x8x128xf32, #tpu.memory_space<vmem>>, vector<1x8x128xf32>,
    return
  }
}

</mosaic_0001>

<llo_original>
// kernel: tpu_custom_call.1
$region0: #{tpu_custom_call.1}
  #allocation0 [shape = 'u32[]', space=smem, size = 0x4, offset = 0x4, fixed_abs, tag = 'smem constant byte address 0x4 - core index']
  #allocation1 [shape = 'u32[144,128]{1,0:T(1,128)}', space=vmem, size = 0x12000, scoped, tag = 'internal scratch']
  #allocation2 [shape = 'f32[16,384]{1,0:T(8,128)}', space=vmem, size = 0x6000, scoped, tag = 'scratch operand']
  #allocation3 [shape = 'f32[16,128]{1,0:T(8,128)}', space=vmem, size = 0x2000, scoped, tag = 'scratch operand']
  %s0 = inlined_call_operand.hbm [shape: f32[16,32], index: 0, kind: input, shape index: {}]
  %s1 = inlined_call_operand.hbm [shape: f32[2,128], index: 1, kind: input, shape index: {}]
  %s2 = inlined_call_operand.hbm [shape: f32[32,384], index: 2, kind: input, shape index: {}]
  %s3 = inlined_call_operand.hbm [shape: f32[128,384], index: 3, kind: input, shape index: {}]
  %s4 = inlined_call_operand.vmem [shape: f32[1,384], index: 4, kind: input, shape index: {}]
  %s5 = inlined_call_operand.vmem [shape: f32[1,128], index: 5, kind: input, shape index: {}]
  %s6 = inlined_call_operand.hbm [shape: f32[128,128], index: 6, kind: input, shape index: {}]
  %s7 = inlined_call_operand.vmem [shape: f32[1,128], index: 7, kind: input, shape index: {}]
  %s8 = inlined_call_operand.hbm [shape: f32[2,8,128], index: 8, kind: output, shape index: {0}]
  %s9 = inlined_call_operand.hbm [shape: f32[2,128], index: 9, kind: output, shape index: {1}]
  %10 = xla_tuple %s8, %s9
  %s11 = sld [smem:[#allocation0]]
  $region70: #{tpu_custom_call.1} parent=0
    _
  %s13 = ssub.s32 1, %s11
  %s14 = scalar_select 0, %s13, %s11
  $region1: #{tpu_custom_call.1} parent=0
    #allocation4 [shape = 'u8[8192]{0}', space=vmem, size = 0x2000, scoped, tag = 'input window, operand 0, single buffered']
    #allocation5 [shape = 's32[1]{0}', space=sflag, size = 0x4, scoped, tag = 'scoped memory for tpu_custom_call.1']
    #allocation6 [shape = 's32[1]{0}', space=sflag, size = 0x4, scoped, tag = 'scoped memory for tpu_custom_call.1']
    #allocation7 [shape = 'u8[1024]{0}', space=vmem, size = 0x400, scoped, tag = 'input window, operand 1, single buffered']
    #allocation8 [shape = 's32[1]{0}', space=sflag, size = 0x4, scoped, tag = 'scoped memory for tpu_custom_call.1']
    #allocation9 [shape = 'u8[49152]{0}', space=vmem, size = 0xc000, scoped, tag = 'input window, operand 2, single buffered']
    #allocation10 [shape = 'u8[196608]{0}', space=vmem, size = 0x30000, scoped, tag = 'input window, operand 3, single buffered']
    #allocation11 [shape = 's32[1]{0}', space=sflag, size = 0x4, scoped, tag = 'scoped memory for tpu_custom_call.1']
    #allocation12 [shape = 'u8[65536]{0}', space=vmem, size = 0x10000, scoped, tag = 'input window, operand 6, single buffered']
    #allocation13 [shape = 'u8[8192]{0}', space=vmem, size = 0x2000, scoped, tag = 'output window, operand 0, single buffered']
    #allocation14 [shape = 'u8[1024]{0}', space=vmem, size = 0x400, scoped, tag = 'output window, operand 1, single buffered']
    #allocation15 [shape = 's32[1]{0}', space=sflag, size = 0x4, scoped, tag = 'scoped memory for tpu_custom_call.1']
    %15 = vsyncpa [#allocation5], 0
    %16 = vsyncpa [#allocation8], 0
    %17 = vsyncpa [#allocation11], 0
    %18 = vsyncpa [#allocation6], 0
    %19 = vsyncpa [#allocation15], 0
    // Predicated region
    $region2: #{tpu_custom_call.1} parent=1 // pred_check
      _
    $region3: #{tpu_custom_call.1} parent=1 // pred_check_branch
      %21 = sbr.rel (0) target = $region5
    $region4: #{tpu_custom_call.1} parent=1 // pred_region
      %s23 = ssub.s32 256, 256
      %24 = vsyncadd [#allocation5], %s23
      %s25 = sshll.u32 [#allocation4], 4
      %s26 = int_to_ptr.vmem [resolvable:$true] %s25
      %31 = dma.hbm_to_vmem [thread:$0]  %s0, 256, %s26, [#allocation5], 128, 128, 8
    $region5: #{tpu_custom_call.1} parent=1 // pred_fallthru
      _
    // Predicated region
    $region6: #{tpu_custom_call.1} parent=1 // pred_check
      _
    $region7: #{tpu_custom_call.1} parent=1 // pred_check_branch
      %33 = sbr.rel (0) target = $region9
    $region8: #{tpu_custom_call.1} parent=1 // pred_region
      %s35 = ssub.s32 32, 32
      %36 = vsyncadd [#allocation8], %s35
      %s38 = sshll.u32 [#allocation7], 4
      %s39 = int_to_ptr.vmem [resolvable:$true] %s38
      %41 = dma.hbm_to_vmem [thread:$0]  %s1, 32, %s39, [#allocation8]
    $region9: #{tpu_custom_call.1} parent=1 // pred_fallthru
      _
    // Predicated region
    $region10: #{tpu_custom_call.1} parent=1 // pred_check
      _
    $region11: #{tpu_custom_call.1} parent=1 // pred_check_branch
      %43 = sbr.rel (0) target = $region13
    $region12: #{tpu_custom_call.1} parent=1 // pred_region
      %s45 = ssub.s32 1536, 1536
      %46 = vsyncadd [#allocation8], %s45
      %s47 = sshll.u32 [#allocation9], 4
      %s48 = int_to_ptr.vmem [resolvable:$true] %s47
      %53 = dma.hbm_to_vmem [thread:$0]  %s2, 1536, %s48, [#allocation8], 384, 384, 24
    $region13: #{tpu_custom_call.1} parent=1 // pred_fallthru
      _
    // Predicated region
    $region14: #{tpu_custom_call.1} parent=1 // pred_check
      _
    $region15: #{tpu_custom_call.1} parent=1 // pred_check_branch
      %55 = sbr.rel (0) target = $region17
    $region16: #{tpu_custom_call.1} parent=1 // pred_region
      %s57 = ssub.s32 6144, 6144
      %58 = vsyncadd [#allocation11], %s57
      %s59 = sshll.u32 [#allocation10], 4
      %s60 = int_to_ptr.vmem [resolvable:$true] %s59
      %65 = dma.hbm_to_vmem [thread:$0]  %s3, 6144, %s60, [#allocation11], 384, 384, 24
    $region17: #{tpu_custom_call.1} parent=1 // pred_fallthru
      _
    // Predicated region
    $region18: #{tpu_custom_call.1} parent=1 // pred_check
      _
    $region19: #{tpu_custom_call.1} parent=1 // pred_check_branch
      %67 = sbr.rel (0) target = $region21
    $region20: #{tpu_custom_call.1} parent=1 // pred_region
      _
    $region21: #{tpu_custom_call.1} parent=1 // pred_fallthru
      _
    // Predicated region
    $region22: #{tpu_custom_call.1} parent=1 // pred_check
      _
    $region23: #{tpu_custom_call.1} parent=1 // pred_check_branch
      %69 = sbr.rel (0) target = $region25
    $region24: #{tpu_custom_call.1} parent=1 // pred_region
      _
    $region25: #{tpu_custom_call.1} parent=1 // pred_fallthru
      _
    // Predicated region
    $region26: #{tpu_custom_call.1} parent=1 // pred_check
      _
    $region27: #{tpu_custom_call.1} parent=1 // pred_check_branch
      %71 = sbr.rel (0) target = $region29
    $region28: #{tpu_custom_call.1} parent=1 // pred_region
      %s73 = ssub.s32 2048, 2048
      %74 = vsyncadd [#allocation11], %s73
      %s75 = sshll.u32 [#allocation12], 4
      %s76 = int_to_ptr.vmem [resolvable:$true] %s75
      %81 = dma.hbm_to_vmem [thread:$0]  %s6, 2048, %s76, [#allocation11], 128, 128, 8
    $region29: #{tpu_custom_call.1} parent=1 // pred_fallthru
      _
    // Predicated region
    $region30: #{tpu_custom_call.1} parent=1 // pred_check
      _
    $region31: #{tpu_custom_call.1} parent=1 // pred_check_branch
      %83 = sbr.rel (0) target = $region33
    $region32: #{tpu_custom_call.1} parent=1 // pred_region
      _
    $region33: #{tpu_custom_call.1} parent=1 // pred_fallthru
      _
    // Predicated region
    $region34: #{tpu_custom_call.1} parent=1 // pred_check
      _
    $region35: #{tpu_custom_call.1} parent=1 // pred_check_branch
      %85 = sbr.rel (0) target = $region37
    $region36: #{tpu_custom_call.1} parent=1 // pred_region
      %86 = dma.done [#allocation5], 256
    $region37: #{tpu_custom_call.1} parent=1 // pred_fallthru
      _
    // Predicated region
    $region38: #{tpu_custom_call.1} parent=1 // pred_check
      _
    $region39: #{tpu_custom_call.1} parent=1 // pred_check_branch
      %88 = sbr.rel (0) target = $region41
    $region40: #{tpu_custom_call.1} parent=1 // pred_region
      %89 = dma.done [#allocation8], 32
    $region41: #{tpu_custom_call.1} parent=1 // pred_fallthru
      _
    // Predicated region
    $region42: #{tpu_custom_call.1} parent=1 // pred_check
      _
    $region43: #{tpu_custom_call.1} parent=1 // pred_check_branch
      %91 = sbr.rel (0) target = $region45
    $region44: #{tpu_custom_call.1} parent=1 // pred_region
      %92 = dma.done [#allocation8], 1536
    $region45: #{tpu_custom_call.1} parent=1 // pred_fallthru
      _
    // Predicated region
    $region46: #{tpu_custom_call.1} parent=1 // pred_check
      _
    $region47: #{tpu_custom_call.1} parent=1 // pred_check_branch
      %94 = sbr.rel (0) target = $region49
    $region48: #{tpu_custom_call.1} parent=1 // pred_region
      %95 = dma.done [#allocation11], 6144
    $region49: #{tpu_custom_call.1} parent=1 // pred_fallthru
      _
    // Predicated region
    $region50: #{tpu_custom_call.1} parent=1 // pred_check
      _
    $region51: #{tpu_custom_call.1} parent=1 // pred_check_branch
      %97 = sbr.rel (0) target = $region53
    $region52: #{tpu_custom_call.1} parent=1 // pred_region
      %98 = dma.done [#allocation11], 2048
    $region53: #{tpu_custom_call.1} parent=1 // pred_fallthru
      _
    %v99 = vld [vmem:[#allocation4] sm:$0xff]
    %v100 = vld [vmem:[#allocation4 + $0x8] sm:$0xff]
    %v101 = vmax.f32 %v99, 0.0
    %v102 = vmax.f32 %v100, 0.0
    %v103 = vld [vmem:[#allocation9] sm:$0xff]
    %v104 = vld [vmem:[#allocation9 + $0x8] sm:$0xff]
    %v105 = vld [vmem:[#allocation9 + $0x10] sm:$0xff]
    %v106 = vld [vmem:[#allocation9 + $0x18] sm:$0xff]
    %v107 = vld [vmem:[#allocation9 + $0x20] sm:$0xff]
    %v108 = vld [vmem:[#allocation9 + $0x28] sm:$0xff]
    %v109 = vld [vmem:[#allocation9 + $0x30] sm:$0xff]
    %v110 = vld [vmem:[#allocation9 + $0x38] sm:$0xff]
    %v111 = vld [vmem:[#allocation9 + $0x40] sm:$0xff]
    %v112 = vld [vmem:[#allocation9 + $0x48] sm:$0xff]
    %v113 = vld [vmem:[#allocation9 + $0x50] sm:$0xff]
    %v114 = vld [vmem:[#allocation9 + $0x58] sm:$0xff]
    %v115 = vld [vmem:[%s4] sm:$0x7]
    %v117 = vlaneseq
    %v118 = vshrl.u32 %v117, 7
    %v119 = vsub.s32 0, %v118
    %v120 = vrot.slane %v115, %v119
    %v121 = vlaneseq
    %v122 = vshrl.u32 %v121, 7
    %v123 = vsub.s32 1, %v122
    %v124 = vrot.slane %v115, %v123
    %v125 = vlaneseq
    %v126 = vshrl.u32 %v125, 7
    %v127 = vsub.s32 2, %v126
    %v128 = vrot.slane %v115, %v127
    %vm132 = vcmask 261120
    %v134 = vsel %vm132, %v101, 0
    %v137 = vsel %vm132, %v102, 0
    %139 = vmatprep.subr.mxu0 0.0
    %140 = vmatpush1.msra.mxu0 0.0
    %141 = vmatprep.subr.mxu0 0.0
    %142 = vmatpush1.msra.mxu0 0.0
    %143 = vmatprep.subr.mxu0 0.0
    %144 = vmatpush1.msra.mxu0 0.0
    %145 = vmatprep.subr.mxu0 0.0
    %146 = vmatpush1.msra.mxu0 0.0
    %147 = vmatprep.subr.mxu0 0.0
    %148 = vmatpush1.msra.mxu0 0.0
    %149 = vmatprep.subr.mxu0 0.0
    %150 = vmatpush1.msra.mxu0 0.0
    %151 = vmatprep.subr.mxu0 0.0
    %152 = vmatpush1.msra.mxu0 0.0
    %153 = vmatprep.subr.mxu0 0.0
    %154 = vmatpush1.msra.mxu0 0.0
    %155 = vmatprep.subr.mxu0 0.0
    %156 = vmatpush1.msra.mxu0 0.0
    %157 = vmatprep.subr.mxu0 0.0
    %158 = vmatpush1.msra.mxu0 0.0
    %159 = vmatprep.subr.mxu0 0.0
    %160 = vmatpush1.msra.mxu0 0.0
    %161 = vmatprep.subr.mxu0 0.0
    %162 = vmatpush1.msra.mxu0 0.0
    %163 = vmatprep.subr.mxu0 %v113
    %164 = vmatpush1.msra.mxu0 %v112
    %165 = vmatprep.subr.mxu0 %v110
    %166 = vmatpush1.msra.mxu0 %v109
    %167 = vmatprep.subr.mxu0 %v107
    %168 = vmatpush1.msra.mxu0 %v106
    %169 = vmatprep.subr.mxu0 %v104
    %170 = vmatpush1.msra.mxu0 %v103
    %171 = vmatprep.subr.mxu0 0.0
    %172 = vmatpush2.msra.mxu0 0.0
    %173 = vmatprep.subr.mxu0 0.0
    %174 = vmatpush2.msra.mxu0 0.0
    %175 = vmatprep.subr.mxu0 0.0
    %176 = vmatpush2.msra.mxu0 0.0
    %177 = vmatprep.subr.mxu0 0.0
    %178 = vmatpush2.msra.mxu0 0.0
    %179 = vmatprep.subr.mxu0 0.0
    %180 = vmatpush2.msra.mxu0 0.0
    %181 = vmatprep.subr.mxu0 0.0
    %182 = vmatpush2.msra.mxu0 0.0
    %183 = vmatprep.subr.mxu0 0.0
    %184 = vmatpush2.msra.mxu0 0.0
    %185 = vmatprep.subr.mxu0 0.0
    %186 = vmatpush2.msra.mxu0 0.0
    %187 = vmatprep.subr.mxu0 0.0
    %188 = vmatpush2.msra.mxu0 0.0
    %189 = vmatprep.subr.mxu0 0.0
    %190 = vmatpush2.msra.mxu0 0.0
    %191 = vmatprep.subr.mxu0 0.0
    %192 = vmatpush2.msra.mxu0 0.0
    %193 = vmatprep.subr.mxu0 0.0
    %194 = vmatpush2.msra.mxu0 0.0
    %195 = vmatprep.subr.mxu0 0.0
    %196 = vmatpush2.msra.mxu0 0.0
    %197 = vmatprep.subr.mxu0 0.0
    %198 = vmatpush2.msra.mxu0 0.0
    %199 = vmatprep.subr.mxu0 0.0
    %200 = vmatpush2.msra.mxu0 0.0
    %201 = vmatprep.subr.mxu0 0.0
    %202 = vmatpush2.msra.mxu0 0.0
    %203 = vmatprep.mubr.f32.mxu0 0.0
    %204 = vmatmul.mubr.f32.gmra.mxu0 %v134
    %v205 = vpop.f32.mrf.mxu0
    %v206 = vadd.f32 %v120, %v205
    %v207 = vpop.f32.mrf.mxu0
    %v208 = vadd.f32 %v124, %v207
    %209 = vmatprep.mubr.f32.mxu0 0.0
    %210 = vmatmul.mubr.f32.gmra.mxu0 %v137
    %v211 = vpop.f32.mrf.mxu0
    %v212 = vadd.f32 %v120, %v211
    %v213 = vpop.f32.mrf.mxu0
    %v214 = vadd.f32 %v124, %v213
    %215 = vdwg.mxu0
    %216 = vmatprep.subr.mxu0 0.0
    %217 = vmatpush1.msra.mxu0 0.0
    %218 = vmatprep.subr.mxu0 0.0
    %219 = vmatpush1.msra.mxu0 0.0
    %220 = vmatprep.subr.mxu0 0.0
    %221 = vmatpush1.msra.mxu0 0.0
    %222 = vmatprep.subr.mxu0 0.0
    %223 = vmatpush1.msra.mxu0 0.0
    %224 = vmatprep.subr.mxu0 0.0
    %225 = vmatpush1.msra.mxu0 0.0
    %226 = vmatprep.subr.mxu0 0.0
    %227 = vmatpush1.msra.mxu0 0.0
    %228 = vmatprep.subr.mxu0 0.0
    %229 = vmatpush1.msra.mxu0 0.0
    %230 = vmatprep.subr.mxu0 0.0
    %231 = vmatpush1.msra.mxu0 0.0
    %232 = vmatprep.subr.mxu0 0.0
    %233 = vmatpush1.msra.mxu0 0.0
    %234 = vmatprep.subr.mxu0 0.0
    %235 = vmatpush1.msra.mxu0 0.0
    %236 = vmatprep.subr.mxu0 0.0
    %237 = vmatpush1.msra.mxu0 0.0
    %238 = vmatprep.subr.mxu0 0.0
    %239 = vmatpush1.msra.mxu0 0.0
    %240 = vmatprep.subr.mxu0 0.0
    %241 = vmatpush1.msra.mxu0 %v114
    %242 = vmatprep.subr.mxu0 0.0
    %243 = vmatpush1.msra.mxu0 %v111
    %244 = vmatprep.subr.mxu0 0.0
    %245 = vmatpush1.msra.mxu0 %v108
    %246 = vmatprep.subr.mxu0 0.0
    %247 = vmatpush1.msra.mxu0 %v105
    %248 = vmatprep.subr.mxu0 0.0
    %249 = vmatpush2.msra.mxu0 0.0
    %250 = vmatprep.subr.mxu0 0.0
    %251 = vmatpush2.msra.mxu0 0.0
    %252 = vmatprep.subr.mxu0 0.0
    %253 = vmatpush2.msra.mxu0 0.0
    %254 = vmatprep.subr.mxu0 0.0
    %255 = vmatpush2.msra.mxu0 0.0
    %256 = vmatprep.subr.mxu0 0.0
    %257 = vmatpush2.msra.mxu0 0.0
    %258 = vmatprep.subr.mxu0 0.0
    %259 = vmatpush2.msra.mxu0 0.0
    %260 = vmatprep.subr.mxu0 0.0
    %261 = vmatpush2.msra.mxu0 0.0
    %262 = vmatprep.subr.mxu0 0.0
    %263 = vmatpush2.msra.mxu0 0.0
    %264 = vmatprep.subr.mxu0 0.0
    %265 = vmatpush2.msra.mxu0 0.0
    %266 = vmatprep.subr.mxu0 0.0
    %267 = vmatpush2.msra.mxu0 0.0
    %268 = vmatprep.subr.mxu0 0.0
    %269 = vmatpush2.msra.mxu0 0.0
    %270 = vmatprep.subr.mxu0 0.0
    %271 = vmatpush2.msra.mxu0 0.0
    %272 = vmatprep.subr.mxu0 0.0
    %273 = vmatpush2.msra.mxu0 0.0
    %274 = vmatprep.subr.mxu0 0.0
    %275 = vmatpush2.msra.mxu0 0.0
    %276 = vmatprep.subr.mxu0 0.0
    %277 = vmatpush2.msra.mxu0 0.0
    %278 = vmatprep.subr.mxu0 0.0
    %279 = vmatpush2.msra.mxu0 0.0
    %280 = vmatprep.mubr.f32.mxu0 0.0
    %281 = vmatmul.mubr.f32.gmra.mxu0 %v134
    %v282 = vpop.f32.mrf.mxu0
    %v283 = vadd.f32 %v128, %v282
    %v284 = vpop.f32.mrf.mxu0
    %285 = vmatprep.mubr.f32.mxu0 0.0
    %286 = vmatmul.mubr.f32.gmra.mxu0 %v137
    %v287 = vpop.f32.mrf.mxu0
    %v288 = vadd.f32 %v128, %v287
    %v289 = vpop.f32.mrf.mxu0
    %290 = vdwg.mxu0
    %291 = vst [vmem:[#allocation2] sm:$0xff] %v206
    %292 = vst [vmem:[#allocation2 + $0x8] sm:$0xff] %v208
    %293 = vst [vmem:[#allocation2 + $0x10] sm:$0xff] %v283
    %294 = vst [vmem:[#allocation2 + $0x18] sm:$0xff] %v212
    %295 = vst [vmem:[#allocation2 + $0x20] sm:$0xff] %v214
    %296 = vst [vmem:[#allocation2 + $0x28] sm:$0xff] %v288
    %v297 = vld [vmem:[#allocation10] sm:$0xff]
    %v298 = vld [vmem:[#allocation10 + $0x8] sm:$0xff]
    %v299 = vld [vmem:[#allocation10 + $0x10] sm:$0xff]
    %v300 = vld [vmem:[#allocation10 + $0x18] sm:$0xff]
    %v301 = vld [vmem:[#allocation10 + $0x20] sm:$0xff]
    %v302 = vld [vmem:[#allocation10 + $0x28] sm:$0xff]
    %v303 = vld [vmem:[#allocation10 + $0x30] sm:$0xff]
    %v304 = vld [vmem:[#allocation10 + $0x38] sm:$0xff]
    %v305 = vld [vmem:[#allocation10 + $0x40] sm:$0xff]
    %v306 = vld [vmem:[#allocation10 + $0x48] sm:$0xff]
    %v307 = vld [vmem:[#allocation10 + $0x50] sm:$0xff]
    %v308 = vld [vmem:[#allocation10 + $0x58] sm:$0xff]
    %v309 = vld [vmem:[#allocation10 + $0x60] sm:$0xff]
    %v310 = vld [vmem:[#allocation10 + $0x68] sm:$0xff]
    %v311 = vld [vmem:[#allocation10 + $0x70] sm:$0xff]
    %v312 = vld [vmem:[#allocation10 + $0x78] sm:$0xff]
    %v313 = vld [vmem:[#allocation10 + $0x80] sm:$0xff]
    %v314 = vld [vmem:[#allocation10 + $0x88] sm:$0xff]
    %v315 = vld [vmem:[#allocation10 + $0x90] sm:$0xff]
    %v316 = vld [vmem:[#allocation10 + $0x98] sm:$0xff]
    %v317 = vld [vmem:[#allocation10 + $0xa0] sm:$0xff]
    %v318 = vld [vmem:[#allocation10 + $0xa8] sm:$0xff]
    %v319 = vld [vmem:[#allocation10 + $0xb0] sm:$0xff]
    %v320 = vld [vmem:[#allocation10 + $0xb8] sm:$0xff]
    %v321 = vld [vmem:[#allocation10 + $0xc0] sm:$0xff]
    %v322 = vld [vmem:[#allocation10 + $0xc8] sm:$0xff]
    %v323 = vld [vmem:[#allocation10 + $0xd0] sm:$0xff]
    %v324 = vld [vmem:[#allocation10 + $0xd8] sm:$0xff]
    %v325 = vld [vmem:[#allocation10 + $0xe0] sm:$0xff]
    %v326 = vld [vmem:[#allocation10 + $0xe8] sm:$0xff]
    %v327 = vld [vmem:[#allocation10 + $0xf0] sm:$0xff]
    %v328 = vld [vmem:[#allocation10 + $0xf8] sm:$0xff]
    %v329 = vld [vmem:[#allocation10 + $0x100] sm:$0xff]
    %v330 = vld [vmem:[#allocation10 + $0x108] sm:$0xff]
    %v331 = vld [vmem:[#allocation10 + $0x110] sm:$0xff]
    %v332 = vld [vmem:[#allocation10 + $0x118] sm:$0xff]
    %v333 = vld [vmem:[#allocation10 + $0x120] sm:$0xff]
    %v334 = vld [vmem:[#allocation10 + $0x128] sm:$0xff]
    %v335 = vld [vmem:[#allocation10 + $0x130] sm:$0xff]
    %v336 = vld [vmem:[#allocation10 + $0x138] sm:$0xff]
    %v337 = vld [vmem:[#allocation10 + $0x140] sm:$0xff]
    %v338 = vld [vmem:[#allocation10 + $0x148] sm:$0xff]
    %v339 = vld [vmem:[#allocation10 + $0x150] sm:$0xff]
    %v340 = vld [vmem:[#allocation10 + $0x158] sm:$0xff]
    %v341 = vld [vmem:[#allocation10 + $0x160] sm:$0xff]
    %v342 = vld [vmem:[#allocation10 + $0x168] sm:$0xff]
    %v343 = vld [vmem:[#allocation10 + $0x170] sm:$0xff]
    %v344 = vld [vmem:[#allocation10 + $0x178] sm:$0xff]
    %v345 = vld [vmem:[%s5] sm:$0x1]
    %v346 = vld [vmem:[#allocation7] sm:$0x3]
    %v347 = vld [vmem:[#allocation2] sm:$0x3]
    %v348 = vld [vmem:[#allocation2 + $0x8] sm:$0x3]
    %v349 = vld [vmem:[#allocation2 + $0x10] sm:$0x3]
    %350 = vmatprep.subr.mxu0 %v343
    %351 = vmatpush1.msra.mxu0 %v342
    %352 = vmatprep.subr.mxu0 %v340
    %353 = vmatpush1.msra.mxu0 %v339
    %354 = vmatprep.subr.mxu0 %v337
    %355 = vmatpush1.msra.mxu0 %v336
    %356 = vmatprep.subr.mxu0 %v334
    %357 = vmatpush1.msra.mxu0 %v333
    %358 = vmatprep.subr.mxu0 %v331
    %359 = vmatpush1.msra.mxu0 %v330
    %360 = vmatprep.subr.mxu0 %v328
    %361 = vmatpush1.msra.mxu0 %v327
    %362 = vmatprep.subr.mxu0 %v325
    %363 = vmatpush1.msra.mxu0 %v324
    %364 = vmatprep.subr.mxu0 %v322
    %365 = vmatpush1.msra.mxu0 %v321
    %366 = vmatprep.subr.mxu0 %v319
    %367 = vmatpush1.msra.mxu0 %v318
    %368 = vmatprep.subr.mxu0 %v316
    %369 = vmatpush1.msra.mxu0 %v315
    %370 = vmatprep.subr.mxu0 %v313
    %371 = vmatpush1.msra.mxu0 %v312
    %372 = vmatprep.subr.mxu0 %v310
    %373 = vmatpush1.msra.mxu0 %v309
    %374 = vmatprep.subr.mxu0 %v307
    %375 = vmatpush1.msra.mxu0 %v306
    %376 = vmatprep.subr.mxu0 %v304
    %377 = vmatpush1.msra.mxu0 %v303
    %378 = vmatprep.subr.mxu0 %v301
    %379 = vmatpush1.msra.mxu0 %v300
    %380 = vmatprep.subr.mxu0 %v298
    %381 = vmatpush1.msra.mxu0 %v297
    %382 = vmatprep.subr.mxu0 0.0
    %383 = vmatpush2.msra.mxu0 0.0
    %384 = vmatprep.subr.mxu0 0.0
    %385 = vmatpush2.msra.mxu0 0.0
    %386 = vmatprep.subr.mxu0 0.0
    %387 = vmatpush2.msra.mxu0 0.0
    %388 = vmatprep.subr.mxu0 0.0
    %389 = vmatpush2.msra.mxu0 0.0
    %390 = vmatprep.subr.mxu0 0.0
    %391 = vmatpush2.msra.mxu0 0.0
    %392 = vmatprep.subr.mxu0 0.0
    %393 = vmatpush2.msra.mxu0 0.0
    %394 = vmatprep.subr.mxu0 0.0
    %395 = vmatpush2.msra.mxu0 0.0
    %396 = vmatprep.subr.mxu0 0.0
    %397 = vmatpush2.msra.mxu0 0.0
    %398 = vmatprep.subr.mxu0 0.0
    %399 = vmatpush2.msra.mxu0 0.0
    %400 = vmatprep.subr.mxu0 0.0
    %401 = vmatpush2.msra.mxu0 0.0
    %402 = vmatprep.subr.mxu0 0.0
    %403 = vmatpush2.msra.mxu0 0.0
    %404 = vmatprep.subr.mxu0 0.0
    %405 = vmatpush2.msra.mxu0 0.0
    %406 = vmatprep.subr.mxu0 0.0
    %407 = vmatpush2.msra.mxu0 0.0
    %408 = vmatprep.subr.mxu0 0.0
    %409 = vmatpush2.msra.mxu0 0.0
    %410 = vmatprep.subr.mxu0 0.0
    %411 = vmatpush2.msra.mxu0 0.0
    %412 = vmatprep.subr.mxu0 0.0
    %413 = vmatpush2.msra.mxu0 0.0
    %414 = vmatprep.mubr.f32.mxu0 0.0
    %415 = vmatmul.mubr.f32.gmra.mxu0 %v346
    %v416 = vpop.f32.mrf.mxu0
    %v417 = vadd.f32 0.0, %v416
    %v418 = vpop.f32.mrf.mxu0
    %v419 = vadd.f32 0.0, %v418
    %420 = vdwg.mxu0
    %421 = vmatprep.subr.mxu0 0.0
    %422 = vmatpush1.msra.mxu0 %v344
    %423 = vmatprep.subr.mxu0 0.0
    %424 = vmatpush1.msra.mxu0 %v341
    %425 = vmatprep.subr.mxu0 0.0
    %426 = vmatpush1.msra.mxu0 %v338
    %427 = vmatprep.subr.mxu0 0.0
    %428 = vmatpush1.msra.mxu0 %v335
    %429 = vmatprep.subr.mxu0 0.0
    %430 = vmatpush1.msra.mxu0 %v332
    %431 = vmatprep.subr.mxu0 0.0
    %432 = vmatpush1.msra.mxu0 %v329
    %433 = vmatprep.subr.mxu0 0.0
    %434 = vmatpush1.msra.mxu0 %v326
    %435 = vmatprep.subr.mxu0 0.0
    %436 = vmatpush1.msra.mxu0 %v323
    %437 = vmatprep.subr.mxu0 0.0
    %438 = vmatpush1.msra.mxu0 %v320
    %439 = vmatprep.subr.mxu0 0.0
    %440 = vmatpush1.msra.mxu0 %v317
    %441 = vmatprep.subr.mxu0 0.0
    %442 = vmatpush1.msra.mxu0 %v314
    %443 = vmatprep.subr.mxu0 0.0
    %444 = vmatpush1.msra.mxu0 %v311
    %445 = vmatprep.subr.mxu0 0.0
    %446 = vmatpush1.msra.mxu0 %v308
    %447 = vmatprep.subr.mxu0 0.0
    %448 = vmatpush1.msra.mxu0 %v305
    %449 = vmatprep.subr.mxu0 0.0
    %450 = vmatpush1.msra.mxu0 %v302
    %451 = vmatprep.subr.mxu0 0.0
    %452 = vmatpush1.msra.mxu0 %v299
    %453 = vmatprep.subr.mxu0 0.0
    %454 = vmatpush2.msra.mxu0 0.0
    %455 = vmatprep.subr.mxu0 0.0
    %456 = vmatpush2.msra.mxu0 0.0
    %457 = vmatprep.subr.mxu0 0.0
    %458 = vmatpush2.msra.mxu0 0.0
    %459 = vmatprep.subr.mxu0 0.0
    %460 = vmatpush2.msra.mxu0 0.0
    %461 = vmatprep.subr.mxu0 0.0
    %462 = vmatpush2.msra.mxu0 0.0
    %463 = vmatprep.subr.mxu0 0.0
    %464 = vmatpush2.msra.mxu0 0.0
    %465 = vmatprep.subr.mxu0 0.0
    %466 = vmatpush2.msra.mxu0 0.0
    %467 = vmatprep.subr.mxu0 0.0
    %468 = vmatpush2.msra.mxu0 0.0
    %469 = vmatprep.subr.mxu0 0.0
    %470 = vmatpush2.msra.mxu0 0.0
    %471 = vmatprep.subr.mxu0 0.0
    %472 = vmatpush2.msra.mxu0 0.0
    %473 = vmatprep.subr.mxu0 0.0
    %474 = vmatpush2.msra.mxu0 0.0
    %475 = vmatprep.subr.mxu0 0.0
    %476 = vmatpush2.msra.mxu0 0.0
    %477 = vmatprep.subr.mxu0 0.0
    %478 = vmatpush2.msra.mxu0 0.0
    %479 = vmatprep.subr.mxu0 0.0
    %480 = vmatpush2.msra.mxu0 0.0
    %481 = vmatprep.subr.mxu0 0.0
    %482 = vmatpush2.msra.mxu0 0.0
    %483 = vmatprep.subr.mxu0 0.0
    %484 = vmatpush2.msra.mxu0 0.0
    %485 = vmatprep.mubr.f32.mxu0 0.0
    %486 = vmatmul.mubr.f32.gmra.mxu0 %v346
    %v487 = vpop.f32.mrf.mxu0
    %v488 = vadd.f32 0.0, %v487
    %v489 = vpop.f32.mrf.mxu0
    %490 = vdwg.mxu0
    %v491 = vadd.f32 %v347, %v417
    %v492 = vxor.u32 %v491, 2147483648
    %v493 = vmul.f32 %v492, 1.442695
    %v494 = vpow.pop %v493
    %v495 = vadd.f32 %v494, 1.0
    %v496 = vrcp.pop %v495
    %v497 = vmul.f32 1.0, %v496
    %v498 = vadd.f32 %v348, %v419
    %v499 = vxor.u32 %v498, 2147483648
    %v500 = vmul.f32 %v499, 1.442695
    %v501 = vpow.pop %v500
    %v502 = vadd.f32 %v501, 1.0
    %v503 = vrcp.pop %v502
    %v504 = vmul.f32 1.0, %v503
    %v506 = vlaneseq
    %v507 = vshrl.u32 %v506, 7
    %v508 = vsub.s32 0, %v507
    %v509 = vrot.slane %v345, %v508
    %v511 = vadd.f32 %v488, %v509
    %v512 = vmul.f32 %v497, %v511
    %v513 = vadd.f32 %v349, %v512
    %v514 = vtanh.pop %v513
    %v515 = vsub.f32 1.0, %v504
    %v516 = vmul.f32 %v515, %v514
    %v517 = vmul.f32 %v504, %v346
    %v518 = vadd.f32 %v516, %v517
    %519 = vst [vmem:[#allocation3] sm:$0x1] %v518
    %520 = vst [vmem:[#allocation3 + $0x7] sm:$0x2] %v518
    %v521 = vld [vmem:[#allocation2] sm:$0xc]
    %v522 = vld [vmem:[#allocation2 + $0x8] sm:$0xc]
    %v523 = vld [vmem:[#allocation2 + $0x10] sm:$0xc]
    %524 = vmatprep.subr.mxu0 %v343
    %525 = vmatpush1.msra.mxu0 %v342
    %526 = vmatprep.subr.mxu0 %v340
    %527 = vmatpush1.msra.mxu0 %v339
    %528 = vmatprep.subr.mxu0 %v337
    %529 = vmatpush1.msra.mxu0 %v336
    %530 = vmatprep.subr.mxu0 %v334
    %531 = vmatpush1.msra.mxu0 %v333
    %532 = vmatprep.subr.mxu0 %v331
    %533 = vmatpush1.msra.mxu0 %v330
    %534 = vmatprep.subr.mxu0 %v328
    %535 = vmatpush1.msra.mxu0 %v327
    %536 = vmatprep.subr.mxu0 %v325
    %537 = vmatpush1.msra.mxu0 %v324
    %538 = vmatprep.subr.mxu0 %v322
    %539 = vmatpush1.msra.mxu0 %v321
    %540 = vmatprep.subr.mxu0 %v319
    %541 = vmatpush1.msra.mxu0 %v318
    %542 = vmatprep.subr.mxu0 %v316
    %543 = vmatpush1.msra.mxu0 %v315
    %544 = vmatprep.subr.mxu0 %v313
    %545 = vmatpush1.msra.mxu0 %v312
    %546 = vmatprep.subr.mxu0 %v310
    %547 = vmatpush1.msra.mxu0 %v309
    %548 = vmatprep.subr.mxu0 %v307
    %549 = vmatpush1.msra.mxu0 %v306
    %550 = vmatprep.subr.mxu0 %v304
    %551 = vmatpush1.msra.mxu0 %v303
    %552 = vmatprep.subr.mxu0 %v301
    %553 = vmatpush1.msra.mxu0 %v300
    %554 = vmatprep.subr.mxu0 %v298
    %555 = vmatpush1.msra.mxu0 %v297
    %556 = vmatprep.subr.mxu0 0.0
    %557 = vmatpush2.msra.mxu0 0.0
    %558 = vmatprep.subr.mxu0 0.0
    %559 = vmatpush2.msra.mxu0 0.0
    %560 = vmatprep.subr.mxu0 0.0
    %561 = vmatpush2.msra.mxu0 0.0
    %562 = vmatprep.subr.mxu0 0.0
    %563 = vmatpush2.msra.mxu0 0.0
    %564 = vmatprep.subr.mxu0 0.0
    %565 = vmatpush2.msra.mxu0 0.0
    %566 = vmatprep.subr.mxu0 0.0
    %567 = vmatpush2.msra.mxu0 0.0
    %568 = vmatprep.subr.mxu0 0.0
    %569 = vmatpush2.msra.mxu0 0.0
    %570 = vmatprep.subr.mxu0 0.0
    %571 = vmatpush2.msra.mxu0 0.0
    %572 = vmatprep.subr.mxu0 0.0
    %573 = vmatpush2.msra.mxu0 0.0
    %574 = vmatprep.subr.mxu0 0.0
    %575 = vmatpush2.msra.mxu0 0.0
    %576 = vmatprep.subr.mxu0 0.0
    %577 = vmatpush2.msra.mxu0 0.0
    %578 = vmatprep.subr.mxu0 0.0
    %579 = vmatpush2.msra.mxu0 0.0
    %580 = vmatprep.subr.mxu0 0.0
    %581 = vmatpush2.msra.mxu0 0.0
    %582 = vmatprep.subr.mxu0 0.0
    %583 = vmatpush2.msra.mxu0 0.0
    %584 = vmatprep.subr.mxu0 0.0
    %585 = vmatpush2.msra.mxu0 0.0
    %586 = vmatprep.subr.mxu0 0.0
    %587 = vmatpush2.msra.mxu0 0.0
    %588 = vmatprep.mubr.f32.mxu0 0.0
    %589 = vmatmul.mubr.f32.gmra.mxu0 %v518
    %v590 = vpop.f32.mrf.mxu0
    %v591 = vadd.f32 0.0, %v590
    %v592 = vpop.f32.mrf.mxu0
    %v593 = vadd.f32 0.0, %v592
    %594 = vdwg.mxu0
    %595 = vmatprep.subr.mxu0 0.0
    %596 = vmatpush1.msra.mxu0 %v344
    %597 = vmatprep.subr.mxu0 0.0
    %598 = vmatpush1.msra.mxu0 %v341
    %599 = vmatprep.subr.mxu0 0.0
    %600 = vmatpush1.msra.mxu0 %v338
    %601 = vmatprep.subr.mxu0 0.0
    %602 = vmatpush1.msra.mxu0 %v335
    %603 = vmatprep.subr.mxu0 0.0
    %604 = vmatpush1.msra.mxu0 %v332
    %605 = vmatprep.subr.mxu0 0.0
    %606 = vmatpush1.msra.mxu0 %v329
    %607 = vmatprep.subr.mxu0 0.0
    %608 = vmatpush1.msra.mxu0 %v326
    %609 = vmatprep.subr.mxu0 0.0
    %610 = vmatpush1.msra.mxu0 %v323
    %611 = vmatprep.subr.mxu0 0.0
    %612 = vmatpush1.msra.mxu0 %v320
    %613 = vmatprep.subr.mxu0 0.0
    %614 = vmatpush1.msra.mxu0 %v317
    %615 = vmatprep.subr.mxu0 0.0
    %616 = vmatpush1.msra.mxu0 %v314
    %617 = vmatprep.subr.mxu0 0.0
    %618 = vmatpush1.msra.mxu0 %v311
    %619 = vmatprep.subr.mxu0 0.0
    %620 = vmatpush1.msra.mxu0 %v308
    %621 = vmatprep.subr.mxu0 0.0
    %622 = vmatpush1.msra.mxu0 %v305
    %623 = vmatprep.subr.mxu0 0.0
    %624 = vmatpush1.msra.mxu0 %v302
    %625 = vmatprep.subr.mxu0 0.0
    %626 = vmatpush1.msra.mxu0 %v299
    %627 = vmatprep.subr.mxu0 0.0
    %628 = vmatpush2.msra.mxu0 0.0
    %629 = vmatprep.subr.mxu0 0.0
    %630 = vmatpush2.msra.mxu0 0.0
    %631 = vmatprep.subr.mxu0 0.0
    %632 = vmatpush2.msra.mxu0 0.0
    %633 = vmatprep.subr.mxu0 0.0
    %634 = vmatpush2.msra.mxu0 0.0
    %635 = vmatprep.subr.mxu0 0.0
    %636 = vmatpush2.msra.mxu0 0.0
    %637 = vmatprep.subr.mxu0 0.0
    %638 = vmatpush2.msra.mxu0 0.0
    %639 = vmatprep.subr.mxu0 0.0
    %640 = vmatpush2.msra.mxu0 0.0
    %641 = vmatprep.subr.mxu0 0.0
    %642 = vmatpush2.msra.mxu0 0.0
    %643 = vmatprep.subr.mxu0 0.0
    %644 = vmatpush2.msra.mxu0 0.0
    %645 = vmatprep.subr.mxu0 0.0
    %646 = vmatpush2.msra.mxu0 0.0
    %647 = vmatprep.subr.mxu0 0.0
    %648 = vmatpush2.msra.mxu0 0.0
    %649 = vmatprep.subr.mxu0 0.0
    %650 = vmatpush2.msra.mxu0 0.0
    %651 = vmatprep.subr.mxu0 0.0
    %652 = vmatpush2.msra.mxu0 0.0
    %653 = vmatprep.subr.mxu0 0.0
    %654 = vmatpush2.msra.mxu0 0.0
    %655 = vmatprep.subr.mxu0 0.0
    %656 = vmatpush2.msra.mxu0 0.0
    %657 = vmatprep.subr.mxu0 0.0
    %658 = vmatpush2.msra.mxu0 0.0
    %659 = vmatprep.mubr.f32.mxu0 0.0
    %660 = vmatmul.mubr.f32.gmra.mxu0 %v518
    %v661 = vpop.f32.mrf.mxu0
    %v662 = vadd.f32 0.0, %v661
    %v663 = vpop.f32.mrf.mxu0
    %664 = vdwg.mxu0
    %v666 = vrot.slane %v591, 6
    %v668 = vadd.f32 %v521, %v666
    %v669 = vxor.u32 %v668, 2147483648
    %v670 = vmul.f32 %v669, 1.442695
    %v671 = vpow.pop %v670
    %v672 = vadd.f32 %v671, 1.0
    %v673 = vrcp.pop %v672
    %v674 = vmul.f32 1.0, %v673
    %v676 = vrot.slane %v593, 6
    %v678 = vadd.f32 %v522, %v676
    %v679 = vxor.u32 %v678, 2147483648
    %v680 = vmul.f32 %v679, 1.442695
    %v681 = vpow.pop %v680
    %v682 = vadd.f32 %v681, 1.0
    %v683 = vrcp.pop %v682
    %v684 = vmul.f32 1.0, %v683
    %v685 = vadd.f32 %v662, %v509
    %v687 = vrot.slane %v685, 6
    %v689 = vmul.f32 %v674, %v687
    %v690 = vadd.f32 %v523, %v689
    %v691 = vtanh.pop %v690
    %v692 = vsub.f32 1.0, %v684
    %v693 = vmul.f32 %v692, %v691
    %v695 = vrot.slane %v518, 6
    %v697 = vmul.f32 %v684, %v695
    %v698 = vadd.f32 %v693, %v697
    %699 = vst [vmem:[#allocation3 - $0x1] sm:$0x4] %v698
    %700 = vst [vmem:[#allocation3 + $0x6] sm:$0x8] %v698
    %v701 = vld [vmem:[#allocation2] sm:$0x30]
    %v702 = vld [vmem:[#allocation2 + $0x8] sm:$0x30]
    %v703 = vld [vmem:[#allocation2 + $0x10] sm:$0x30]
    %v705 = vrot.slane %v698, 2
    %707 = vmatprep.subr.mxu0 %v343
    %708 = vmatpush1.msra.mxu0 %v342
    %709 = vmatprep.subr.mxu0 %v340
    %710 = vmatpush1.msra.mxu0 %v339
    %711 = vmatprep.subr.mxu0 %v337
    %712 = vmatpush1.msra.mxu0 %v336
    %713 = vmatprep.subr.mxu0 %v334
    %714 = vmatpush1.msra.mxu0 %v333
    %715 = vmatprep.subr.mxu0 %v331
    %716 = vmatpush1.msra.mxu0 %v330
    %717 = vmatprep.subr.mxu0 %v328
    %718 = vmatpush1.msra.mxu0 %v327
    %719 = vmatprep.subr.mxu0 %v325
    %720 = vmatpush1.msra.mxu0 %v324
    %721 = vmatprep.subr.mxu0 %v322
    %722 = vmatpush1.msra.mxu0 %v321
    %723 = vmatprep.subr.mxu0 %v319
    %724 = vmatpush1.msra.mxu0 %v318
    %725 = vmatprep.subr.mxu0 %v316
    %726 = vmatpush1.msra.mxu0 %v315
    %727 = vmatprep.subr.mxu0 %v313
    %728 = vmatpush1.msra.mxu0 %v312
    %729 = vmatprep.subr.mxu0 %v310
    %730 = vmatpush1.msra.mxu0 %v309
    %731 = vmatprep.subr.mxu0 %v307
    %732 = vmatpush1.msra.mxu0 %v306
    %733 = vmatprep.subr.mxu0 %v304
    %734 = vmatpush1.msra.mxu0 %v303
    %735 = vmatprep.subr.mxu0 %v301
    %736 = vmatpush1.msra.mxu0 %v300
    %737 = vmatprep.subr.mxu0 %v298
    %738 = vmatpush1.msra.mxu0 %v297
    %739 = vmatprep.subr.mxu0 0.0
    %740 = vmatpush2.msra.mxu0 0.0
    %741 = vmatprep.subr.mxu0 0.0
    %742 = vmatpush2.msra.mxu0 0.0
    %743 = vmatprep.subr.mxu0 0.0
    %744 = vmatpush2.msra.mxu0 0.0
    %745 = vmatprep.subr.mxu0 0.0
    %746 = vmatpush2.msra.mxu0 0.0
    %747 = vmatprep.subr.mxu0 0.0
    %748 = vmatpush2.msra.mxu0 0.0
    %749 = vmatprep.subr.mxu0 0.0
    %750 = vmatpush2.msra.mxu0 0.0
    %751 = vmatprep.subr.mxu0 0.0
    %752 = vmatpush2.msra.mxu0 0.0
    %753 = vmatprep.subr.mxu0 0.0
    %754 = vmatpush2.msra.mxu0 0.0
    %755 = vmatprep.subr.mxu0 0.0
    %756 = vmatpush2.msra.mxu0 0.0
    %757 = vmatprep.subr.mxu0 0.0
    %758 = vmatpush2.msra.mxu0 0.0
    %759 = vmatprep.subr.mxu0 0.0
    %760 = vmatpush2.msra.mxu0 0.0
    %761 = vmatprep.subr.mxu0 0.0
    %762 = vmatpush2.msra.mxu0 0.0
    %763 = vmatprep.subr.mxu0 0.0
    %764 = vmatpush2.msra.mxu0 0.0
    %765 = vmatprep.subr.mxu0 0.0
    %766 = vmatpush2.msra.mxu0 0.0
    %767 = vmatprep.subr.mxu0 0.0
    %768 = vmatpush2.msra.mxu0 0.0
    %769 = vmatprep.subr.mxu0 0.0
    %770 = vmatpush2.msra.mxu0 0.0
    %771 = vmatprep.mubr.f32.mxu0 0.0
    %772 = vmatmul.mubr.f32.gmra.mxu0 %v705
    %v773 = vpop.f32.mrf.mxu0
    %v774 = vadd.f32 0.0, %v773
    %v775 = vpop.f32.mrf.mxu0
    %v776 = vadd.f32 0.0, %v775
    %777 = vdwg.mxu0
    %778 = vmatprep.subr.mxu0 0.0
    %779 = vmatpush1.msra.mxu0 %v344
    %780 = vmatprep.subr.mxu0 0.0
    %781 = vmatpush1.msra.mxu0 %v341
    %782 = vmatprep.subr.mxu0 0.0
    %783 = vmatpush1.msra.mxu0 %v338
    %784 = vmatprep.subr.mxu0 0.0
    %785 = vmatpush1.msra.mxu0 %v335
    %786 = vmatprep.subr.mxu0 0.0
    %787 = vmatpush1.msra.mxu0 %v332
    %788 = vmatprep.subr.mxu0 0.0
    %789 = vmatpush1.msra.mxu0 %v329
    %790 = vmatprep.subr.mxu0 0.0
    %791 = vmatpush1.msra.mxu0 %v326
    %792 = vmatprep.subr.mxu0 0.0
    %793 = vmatpush1.msra.mxu0 %v323
    %794 = vmatprep.subr.mxu0 0.0
    %795 = vmatpush1.msra.mxu0 %v320
    %796 = vmatprep.subr.mxu0 0.0
    %797 = vmatpush1.msra.mxu0 %v317
    %798 = vmatprep.subr.mxu0 0.0
    %799 = vmatpush1.msra.mxu0 %v314
    %800 = vmatprep.subr.mxu0 0.0
    %801 = vmatpush1.msra.mxu0 %v311
    %802 = vmatprep.subr.mxu0 0.0
    %803 = vmatpush1.msra.mxu0 %v308
    %804 = vmatprep.subr.mxu0 0.0
    %805 = vmatpush1.msra.mxu0 %v305
    %806 = vmatprep.subr.mxu0 0.0
    %807 = vmatpush1.msra.mxu0 %v302
    %808 = vmatprep.subr.mxu0 0.0
    %809 = vmatpush1.msra.mxu0 %v299
    %810 = vmatprep.subr.mxu0 0.0
    %811 = vmatpush2.msra.mxu0 0.0
    %812 = vmatprep.subr.mxu0 0.0
    %813 = vmatpush2.msra.mxu0 0.0
    %814 = vmatprep.subr.mxu0 0.0
    %815 = vmatpush2.msra.mxu0 0.0
    %816 = vmatprep.subr.mxu0 0.0
    %817 = vmatpush2.msra.mxu0 0.0
    %818 = vmatprep.subr.mxu0 0.0
    %819 = vmatpush2.msra.mxu0 0.0
    %820 = vmatprep.subr.mxu0 0.0
    %821 = vmatpush2.msra.mxu0 0.0
    %822 = vmatprep.subr.mxu0 0.0
    %823 = vmatpush2.msra.mxu0 0.0
    %824 = vmatprep.subr.mxu0 0.0
    %825 = vmatpush2.msra.mxu0 0.0
    %826 = vmatprep.subr.mxu0 0.0
    %827 = vmatpush2.msra.mxu0 0.0
    %828 = vmatprep.subr.mxu0 0.0
    %829 = vmatpush2.msra.mxu0 0.0
    %830 = vmatprep.subr.mxu0 0.0
    %831 = vmatpush2.msra.mxu0 0.0
    %832 = vmatprep.subr.mxu0 0.0
    %833 = vmatpush2.msra.mxu0 0.0
    %834 = vmatprep.subr.mxu0 0.0
    %835 = vmatpush2.msra.mxu0 0.0
    %836 = vmatprep.subr.mxu0 0.0
    %837 = vmatpush2.msra.mxu0 0.0
    %838 = vmatprep.subr.mxu0 0.0
    %839 = vmatpush2.msra.mxu0 0.0
    %840 = vmatprep.subr.mxu0 0.0
    %841 = vmatpush2.msra.mxu0 0.0
    %842 = vmatprep.mubr.f32.mxu0 0.0
    %843 = vmatmul.mubr.f32.gmra.mxu0 %v705
    %v844 = vpop.f32.mrf.mxu0
    %v845 = vadd.f32 0.0, %v844
    %v846 = vpop.f32.mrf.mxu0
    %847 = vdwg.mxu0
    %v849 = vrot.slane %v774, 4
    %v851 = vadd.f32 %v701, %v849
    %v852 = vxor.u32 %v851, 2147483648
    %v853 = vmul.f32 %v852, 1.442695
    %v854 = vpow.pop %v853
    %v855 = vadd.f32 %v854, 1.0
    %v856 = vrcp.pop %v855
    %v857 = vmul.f32 1.0, %v856
    %v859 = vrot.slane %v776, 4
    %v861 = vadd.f32 %v702, %v859
    %v862 = vxor.u32 %v861, 2147483648
    %v863 = vmul.f32 %v862, 1.442695
    %v864 = vpow.pop %v863
    %v865 = vadd.f32 %v864, 1.0
    %v866 = vrcp.pop %v865
    %v867 = vmul.f32 1.0, %v866
    %v868 = vadd.f32 %v845, %v509
    %v870 = vrot.slane %v868, 4
    %v872 = vmul.f32 %v857, %v870
    %v873 = vadd.f32 %v703, %v872
    %v874 = vtanh.pop %v873
    %v875 = vsub.f32 1.0, %v867
    %v876 = vmul.f32 %v875, %v874
    %v877 = vrot.slane %v698, 6
    %v879 = vmul.f32 %v867, %v877
    %v880 = vadd.f32 %v876, %v879
    %881 = vst [vmem:[#allocation3 - $0x2] sm:$0x10] %v880
    %882 = vst [vmem:[#allocation3 + $0x5] sm:$0x20] %v880
    %v883 = vld [vmem:[#allocation2] sm:$0xc0]
    %v884 = vld [vmem:[#allocation2 + $0x8] sm:$0xc0]
    %v885 = vld [vmem:[#allocation2 + $0x10] sm:$0xc0]
    %v887 = vrot.slane %v880, 4
    %889 = vmatprep.subr.mxu0 %v343
    %890 = vmatpush1.msra.mxu0 %v342
    %891 = vmatprep.subr.mxu0 %v340
    %892 = vmatpush1.msra.mxu0 %v339
    %893 = vmatprep.subr.mxu0 %v337
    %894 = vmatpush1.msra.mxu0 %v336
    %895 = vmatprep.subr.mxu0 %v334
    %896 = vmatpush1.msra.mxu0 %v333
    %897 = vmatprep.subr.mxu0 %v331
    %898 = vmatpush1.msra.mxu0 %v330
    %899 = vmatprep.subr.mxu0 %v328
    %900 = vmatpush1.msra.mxu0 %v327
    %901 = vmatprep.subr.mxu0 %v325
    %902 = vmatpush1.msra.mxu0 %v324
    %903 = vmatprep.subr.mxu0 %v322
    %904 = vmatpush1.msra.mxu0 %v321
    %905 = vmatprep.subr.mxu0 %v319
    %906 = vmatpush1.msra.mxu0 %v318
    %907 = vmatprep.subr.mxu0 %v316
    %908 = vmatpush1.msra.mxu0 %v315
    %909 = vmatprep.subr.mxu0 %v313
    %910 = vmatpush1.msra.mxu0 %v312
    %911 = vmatprep.subr.mxu0 %v310
    %912 = vmatpush1.msra.mxu0 %v309
    %913 = vmatprep.subr.mxu0 %v307
    %914 = vmatpush1.msra.mxu0 %v306
    %915 = vmatprep.subr.mxu0 %v304
    %916 = vmatpush1.msra.mxu0 %v303
    %917 = vmatprep.subr.mxu0 %v301
    %918 = vmatpush1.msra.mxu0 %v300
    %919 = vmatprep.subr.mxu0 %v298
    %920 = vmatpush1.msra.mxu0 %v297
    %921 = vmatprep.subr.mxu0 0.0
    %922 = vmatpush2.msra.mxu0 0.0
    %923 = vmatprep.subr.mxu0 0.0
    %924 = vmatpush2.msra.mxu0 0.0
    %925 = vmatprep.subr.mxu0 0.0
    %926 = vmatpush2.msra.mxu0 0.0
    %927 = vmatprep.subr.mxu0 0.0
    %928 = vmatpush2.msra.mxu0 0.0
    %929 = vmatprep.subr.mxu0 0.0
    %930 = vmatpush2.msra.mxu0 0.0
    %931 = vmatprep.subr.mxu0 0.0
    %932 = vmatpush2.msra.mxu0 0.0
    %933 = vmatprep.subr.mxu0 0.0
    %934 = vmatpush2.msra.mxu0 0.0
    %935 = vmatprep.subr.mxu0 0.0
    %936 = vmatpush2.msra.mxu0 0.0
    %937 = vmatprep.subr.mxu0 0.0
    %938 = vmatpush2.msra.mxu0 0.0
    %939 = vmatprep.subr.mxu0 0.0
    %940 = vmatpush2.msra.mxu0 0.0
    %941 = vmatprep.subr.mxu0 0.0
    %942 = vmatpush2.msra.mxu0 0.0
    %943 = vmatprep.subr.mxu0 0.0
    %944 = vmatpush2.msra.mxu0 0.0
    %945 = vmatprep.subr.mxu0 0.0
    %946 = vmatpush2.msra.mxu0 0.0
    %947 = vmatprep.subr.mxu0 0.0
    %948 = vmatpush2.msra.mxu0 0.0
    %949 = vmatprep.subr.mxu0 0.0
    %950 = vmatpush2.msra.mxu0 0.0
    %951 = vmatprep.subr.mxu0 0.0
    %952 = vmatpush2.msra.mxu0 0.0
    %953 = vmatprep.mubr.f32.mxu0 0.0
    %954 = vmatmul.mubr.f32.gmra.mxu0 %v887
    %v955 = vpop.f32.mrf.mxu0
    %v956 = vadd.f32 0.0, %v955
    %v957 = vpop.f32.mrf.mxu0
    %v958 = vadd.f32 0.0, %v957
    %959 = vdwg.mxu0
    %960 = vmatprep.subr.mxu0 0.0
    %961 = vmatpush1.msra.mxu0 %v344
    %962 = vmatprep.subr.mxu0 0.0
    %963 = vmatpush1.msra.mxu0 %v341
    %964 = vmatprep.subr.mxu0 0.0
    %965 = vmatpush1.msra.mxu0 %v338
    %966 = vmatprep.subr.mxu0 0.0
    %967 = vmatpush1.msra.mxu0 %v335
    %968 = vmatprep.subr.mxu0 0.0
    %969 = vmatpush1.msra.mxu0 %v332
    %970 = vmatprep.subr.mxu0 0.0
    %971 = vmatpush1.msra.mxu0 %v329
    %972 = vmatprep.subr.mxu0 0.0
    %973 = vmatpush1.msra.mxu0 %v326
    %974 = vmatprep.subr.mxu0 0.0
    %975 = vmatpush1.msra.mxu0 %v323
    %976 = vmatprep.subr.mxu0 0.0
    %977 = vmatpush1.msra.mxu0 %v320
    %978 = vmatprep.subr.mxu0 0.0
    %979 = vmatpush1.msra.mxu0 %v317
    %980 = vmatprep.subr.mxu0 0.0
    %981 = vmatpush1.msra.mxu0 %v314
    %982 = vmatprep.subr.mxu0 0.0
    %983 = vmatpush1.msra.mxu0 %v311
    %984 = vmatprep.subr.mxu0 0.0
    %985 = vmatpush1.msra.mxu0 %v308
    %986 = vmatprep.subr.mxu0 0.0
    %987 = vmatpush1.msra.mxu0 %v305
    %988 = vmatprep.subr.mxu0 0.0
    %989 = vmatpush1.msra.mxu0 %v302
    %990 = vmatprep.subr.mxu0 0.0
    %991 = vmatpush1.msra.mxu0 %v299
    %992 = vmatprep.subr.mxu0 0.0
    %993 = vmatpush2.msra.mxu0 0.0
    %994 = vmatprep.subr.mxu0 0.0
    %995 = vmatpush2.msra.mxu0 0.0
    %996 = vmatprep.subr.mxu0 0.0
    %997 = vmatpush2.msra.mxu0 0.0
    %998 = vmatprep.subr.mxu0 0.0
    %999 = vmatpush2.msra.mxu0 0.0
    %1000 = vmatprep.subr.mxu0 0.0
    %1001 = vmatpush2.msra.mxu0 0.0
    %1002 = vmatprep.subr.mxu0 0.0
    %1003 = vmatpush2.msra.mxu0 0.0
    %1004 = vmatprep.subr.mxu0 0.0
    %1005 = vmatpush2.msra.mxu0 0.0
    %1006 = vmatprep.subr.mxu0 0.0
    %1007 = vmatpush2.msra.mxu0 0.0
    %1008 = vmatprep.subr.mxu0 0.0
    %1009 = vmatpush2.msra.mxu0 0.0
    %1010 = vmatprep.subr.mxu0 0.0
    %1011 = vmatpush2.msra.mxu0 0.0
    %1012 = vmatprep.subr.mxu0 0.0
    %1013 = vmatpush2.msra.mxu0 0.0
    %1014 = vmatprep.subr.mxu0 0.0
    %1015 = vmatpush2.msra.mxu0 0.0
    %1016 = vmatprep.subr.mxu0 0.0
    %1017 = vmatpush2.msra.mxu0 0.0
    %1018 = vmatprep.subr.mxu0 0.0
    %1019 = vmatpush2.msra.mxu0 0.0
    %1020 = vmatprep.subr.mxu0 0.0
    %1021 = vmatpush2.msra.mxu0 0.0
    %1022 = vmatprep.subr.mxu0 0.0
    %1023 = vmatpush2.msra.mxu0 0.0
    %1024 = vmatprep.mubr.f32.mxu0 0.0
    %1025 = vmatmul.mubr.f32.gmra.mxu0 %v887
    %v1026 = vpop.f32.mrf.mxu0
    %v1027 = vadd.f32 0.0, %v1026
    %v1028 = vpop.f32.mrf.mxu0
    %1029 = vdwg.mxu0
    %v1031 = vrot.slane %v956, 2
    %v1033 = vadd.f32 %v883, %v1031
    %v1034 = vxor.u32 %v1033, 2147483648
    %v1035 = vmul.f32 %v1034, 1.442695
    %v1036 = vpow.pop %v1035
    %v1037 = vadd.f32 %v1036, 1.0
    %v1038 = vrcp.pop %v1037
    %v1039 = vmul.f32 1.0, %v1038
    %v1041 = vrot.slane %v958, 2
    %v1043 = vadd.f32 %v884, %v1041
    %v1044 = vxor.u32 %v1043, 2147483648
    %v1045 = vmul.f32 %v1044, 1.442695
    %v1046 = vpow.pop %v1045
    %v1047 = vadd.f32 %v1046, 1.0
    %v1048 = vrcp.pop %v1047
    %v1049 = vmul.f32 1.0, %v1048
    %v1050 = vadd.f32 %v1027, %v509
    %v1052 = vrot.slane %v1050, 2
    %v1054 = vmul.f32 %v1039, %v1052
    %v1055 = vadd.f32 %v885, %v1054
    %v1056 = vtanh.pop %v1055
    %v1057 = vsub.f32 1.0, %v1049
    %v1058 = vmul.f32 %v1057, %v1056
    %v1059 = vrot.slane %v880, 6
    %v1061 = vmul.f32 %v1049, %v1059
    %v1062 = vadd.f32 %v1058, %v1061
    %1063 = vst [vmem:[#allocation3 - $0x3] sm:$0x40] %v1062
    %1064 = vst [vmem:[#allocation3 + $0x4] sm:$0x80] %v1062
    %v1065 = vld [vmem:[#allocation2 + $0x18] sm:$0x3]
    %v1066 = vld [vmem:[#allocation2 + $0x20] sm:$0x3]
    %v1067 = vld [vmem:[#allocation2 + $0x28] sm:$0x3]
    %v1069 = vrot.slane %v1062, 6
    %1071 = vmatprep.subr.mxu0 %v343
    %1072 = vmatpush1.msra.mxu0 %v342
    %1073 = vmatprep.subr.mxu0 %v340
    %1074 = vmatpush1.msra.mxu0 %v339
    %1075 = vmatprep.subr.mxu0 %v337
    %1076 = vmatpush1.msra.mxu0 %v336
    %1077 = vmatprep.subr.mxu0 %v334
    %1078 = vmatpush1.msra.mxu0 %v333
    %1079 = vmatprep.subr.mxu0 %v331
    %1080 = vmatpush1.msra.mxu0 %v330
    %1081 = vmatprep.subr.mxu0 %v328
    %1082 = vmatpush1.msra.mxu0 %v327
    %1083 = vmatprep.subr.mxu0 %v325
    %1084 = vmatpush1.msra.mxu0 %v324
    %1085 = vmatprep.subr.mxu0 %v322
    %1086 = vmatpush1.msra.mxu0 %v321
    %1087 = vmatprep.subr.mxu0 %v319
    %1088 = vmatpush1.msra.mxu0 %v318
    %1089 = vmatprep.subr.mxu0 %v316
    %1090 = vmatpush1.msra.mxu0 %v315
    %1091 = vmatprep.subr.mxu0 %v313
    %1092 = vmatpush1.msra.mxu0 %v312
    %1093 = vmatprep.subr.mxu0 %v310
    %1094 = vmatpush1.msra.mxu0 %v309
    %1095 = vmatprep.subr.mxu0 %v307
    %1096 = vmatpush1.msra.mxu0 %v306
    %1097 = vmatprep.subr.mxu0 %v304
    %1098 = vmatpush1.msra.mxu0 %v303
    %1099 = vmatprep.subr.mxu0 %v301
    %1100 = vmatpush1.msra.mxu0 %v300
    %1101 = vmatprep.subr.mxu0 %v298
    %1102 = vmatpush1.msra.mxu0 %v297
    %1103 = vmatprep.subr.mxu0 0.0
    %1104 = vmatpush2.msra.mxu0 0.0
    %1105 = vmatprep.subr.mxu0 0.0
    %1106 = vmatpush2.msra.mxu0 0.0
    %1107 = vmatprep.subr.mxu0 0.0
    %1108 = vmatpush2.msra.mxu0 0.0
    %1109 = vmatprep.subr.mxu0 0.0
    %1110 = vmatpush2.msra.mxu0 0.0
    %1111 = vmatprep.subr.mxu0 0.0
    %1112 = vmatpush2.msra.mxu0 0.0
    %1113 = vmatprep.subr.mxu0 0.0
    %1114 = vmatpush2.msra.mxu0 0.0
    %1115 = vmatprep.subr.mxu0 0.0
    %1116 = vmatpush2.msra.mxu0 0.0
    %1117 = vmatprep.subr.mxu0 0.0
    %1118 = vmatpush2.msra.mxu0 0.0
    %1119 = vmatprep.subr.mxu0 0.0
    %1120 = vmatpush2.msra.mxu0 0.0
    %1121 = vmatprep.subr.mxu0 0.0
    %1122 = vmatpush2.msra.mxu0 0.0
    %1123 = vmatprep.subr.mxu0 0.0
    %1124 = vmatpush2.msra.mxu0 0.0
    %1125 = vmatprep.subr.mxu0 0.0
    %1126 = vmatpush2.msra.mxu0 0.0
    %1127 = vmatprep.subr.mxu0 0.0
    %1128 = vmatpush2.msra.mxu0 0.0
    %1129 = vmatprep.subr.mxu0 0.0
    %1130 = vmatpush2.msra.mxu0 0.0
    %1131 = vmatprep.subr.mxu0 0.0
    %1132 = vmatpush2.msra.mxu0 0.0
    %1133 = vmatprep.subr.mxu0 0.0
    %1134 = vmatpush2.msra.mxu0 0.0
    %1135 = vmatprep.mubr.f32.mxu0 0.0
    %1136 = vmatmul.mubr.f32.gmra.mxu0 %v1069
    %v1137 = vpop.f32.mrf.mxu0
    %v1138 = vadd.f32 0.0, %v1137
    %v1139 = vpop.f32.mrf.mxu0
    %v1140 = vadd.f32 0.0, %v1139
    %1141 = vdwg.mxu0
    %1142 = vmatprep.subr.mxu0 0.0
    %1143 = vmatpush1.msra.mxu0 %v344
    %1144 = vmatprep.subr.mxu0 0.0
    %1145 = vmatpush1.msra.mxu0 %v341
    %1146 = vmatprep.subr.mxu0 0.0
    %1147 = vmatpush1.msra.mxu0 %v338
    %1148 = vmatprep.subr.mxu0 0.0
    %1149 = vmatpush1.msra.mxu0 %v335
    %1150 = vmatprep.subr.mxu0 0.0
    %1151 = vmatpush1.msra.mxu0 %v332
    %1152 = vmatprep.subr.mxu0 0.0
    %1153 = vmatpush1.msra.mxu0 %v329
    %1154 = vmatprep.subr.mxu0 0.0
    %1155 = vmatpush1.msra.mxu0 %v326
    %1156 = vmatprep.subr.mxu0 0.0
    %1157 = vmatpush1.msra.mxu0 %v323
    %1158 = vmatprep.subr.mxu0 0.0
    %1159 = vmatpush1.msra.mxu0 %v320
    %1160 = vmatprep.subr.mxu0 0.0
    %1161 = vmatpush1.msra.mxu0 %v317
    %1162 = vmatprep.subr.mxu0 0.0
    %1163 = vmatpush1.msra.mxu0 %v314
    %1164 = vmatprep.subr.mxu0 0.0
    %1165 = vmatpush1.msra.mxu0 %v311
    %1166 = vmatprep.subr.mxu0 0.0
    %1167 = vmatpush1.msra.mxu0 %v308
    %1168 = vmatprep.subr.mxu0 0.0
    %1169 = vmatpush1.msra.mxu0 %v305
    %1170 = vmatprep.subr.mxu0 0.0
    %1171 = vmatpush1.msra.mxu0 %v302
    %1172 = vmatprep.subr.mxu0 0.0
    %1173 = vmatpush1.msra.mxu0 %v299
    %1174 = vmatprep.subr.mxu0 0.0
    %1175 = vmatpush2.msra.mxu0 0.0
    %1176 = vmatprep.subr.mxu0 0.0
    %1177 = vmatpush2.msra.mxu0 0.0
    %1178 = vmatprep.subr.mxu0 0.0
    %1179 = vmatpush2.msra.mxu0 0.0
    %1180 = vmatprep.subr.mxu0 0.0
    %1181 = vmatpush2.msra.mxu0 0.0
    %1182 = vmatprep.subr.mxu0 0.0
    %1183 = vmatpush2.msra.mxu0 0.0
    %1184 = vmatprep.subr.mxu0 0.0
    %1185 = vmatpush2.msra.mxu0 0.0
    %1186 = vmatprep.subr.mxu0 0.0
    %1187 = vmatpush2.msra.mxu0 0.0
    %1188 = vmatprep.subr.mxu0 0.0
    %1189 = vmatpush2.msra.mxu0 0.0
    %1190 = vmatprep.subr.mxu0 0.0
    %1191 = vmatpush2.msra.mxu0 0.0
    %1192 = vmatprep.subr.mxu0 0.0
    %1193 = vmatpush2.msra.mxu0 0.0
    %1194 = vmatprep.subr.mxu0 0.0
    %1195 = vmatpush2.msra.mxu0 0.0
    %1196 = vmatprep.subr.mxu0 0.0
    %1197 = vmatpush2.msra.mxu0 0.0
    %1198 = vmatprep.subr.mxu0 0.0
    %1199 = vmatpush2.msra.mxu0 0.0
    %1200 = vmatprep.subr.mxu0 0.0
    %1201 = vmatpush2.msra.mxu0 0.0
    %1202 = vmatprep.subr.mxu0 0.0
    %1203 = vmatpush2.msra.mxu0 0.0
    %1204 = vmatprep.subr.mxu0 0.0
    %1205 = vmatpush2.msra.mxu0 0.0
    %1206 = vmatprep.mubr.f32.mxu0 0.0
    %1207 = vmatmul.mubr.f32.gmra.mxu0 %v1069
    %v1208 = vpop.f32.mrf.mxu0
    %v1209 = vadd.f32 0.0, %v1208
    %v1210 = vpop.f32.mrf.mxu0
    %1211 = vdwg.mxu0
    %v1212 = vadd.f32 %v1065, %v1138
    %v1213 = vxor.u32 %v1212, 2147483648
    %v1214 = vmul.f32 %v1213, 1.442695
    %v1215 = vpow.pop %v1214
    %v1216 = vadd.f32 %v1215, 1.0
    %v1217 = vrcp.pop %v1216
    %v1218 = vmul.f32 1.0, %v1217
    %v1219 = vadd.f32 %v1066, %v1140
    %v1220 = vxor.u32 %v1219, 2147483648
    %v1221 = vmul.f32 %v1220, 1.442695
    %v1222 = vpow.pop %v1221
    %v1223 = vadd.f32 %v1222, 1.0
    %v1224 = vrcp.pop %v1223
    %v1225 = vmul.f32 1.0, %v1224
    %v1226 = vadd.f32 %v1209, %v509
    %v1227 = vmul.f32 %v1218, %v1226
    %v1228 = vadd.f32 %v1067, %v1227
    %v1229 = vtanh.pop %v1228
    %v1230 = vsub.f32 1.0, %v1225
    %v1231 = vmul.f32 %v1230, %v1229
    %v1232 = vmul.f32 %v1225, %v1069
    %v1233 = vadd.f32 %v1231, %v1232
    %1234 = vst [vmem:[#allocation3 + $0x4] sm:$0x1] %v1233
    %1235 = vst [vmem:[#allocation3 + $0xb] sm:$0x2] %v1233
    %v1236 = vld [vmem:[#allocation2 + $0x18] sm:$0xc]
    %v1237 = vld [vmem:[#allocation2 + $0x20] sm:$0xc]
    %v1238 = vld [vmem:[#allocation2 + $0x28] sm:$0xc]
    %1239 = vmatprep.subr.mxu0 %v343
    %1240 = vmatpush1.msra.mxu0 %v342
    %1241 = vmatprep.subr.mxu0 %v340
    %1242 = vmatpush1.msra.mxu0 %v339
    %1243 = vmatprep.subr.mxu0 %v337
    %1244 = vmatpush1.msra.mxu0 %v336
    %1245 = vmatprep.subr.mxu0 %v334
    %1246 = vmatpush1.msra.mxu0 %v333
    %1247 = vmatprep.subr.mxu0 %v331
    %1248 = vmatpush1.msra.mxu0 %v330
    %1249 = vmatprep.subr.mxu0 %v328
    %1250 = vmatpush1.msra.mxu0 %v327
    %1251 = vmatprep.subr.mxu0 %v325
    %1252 = vmatpush1.msra.mxu0 %v324
    %1253 = vmatprep.subr.mxu0 %v322
    %1254 = vmatpush1.msra.mxu0 %v321
    %1255 = vmatprep.subr.mxu0 %v319
    %1256 = vmatpush1.msra.mxu0 %v318
    %1257 = vmatprep.subr.mxu0 %v316
    %1258 = vmatpush1.msra.mxu0 %v315
    %1259 = vmatprep.subr.mxu0 %v313
    %1260 = vmatpush1.msra.mxu0 %v312
    %1261 = vmatprep.subr.mxu0 %v310
    %1262 = vmatpush1.msra.mxu0 %v309
    %1263 = vmatprep.subr.mxu0 %v307
    %1264 = vmatpush1.msra.mxu0 %v306
    %1265 = vmatprep.subr.mxu0 %v304
    %1266 = vmatpush1.msra.mxu0 %v303
    %1267 = vmatprep.subr.mxu0 %v301
    %1268 = vmatpush1.msra.mxu0 %v300
    %1269 = vmatprep.subr.mxu0 %v298
    %1270 = vmatpush1.msra.mxu0 %v297
    %1271 = vmatprep.subr.mxu0 0.0
    %1272 = vmatpush2.msra.mxu0 0.0
    %1273 = vmatprep.subr.mxu0 0.0
    %1274 = vmatpush2.msra.mxu0 0.0
    %1275 = vmatprep.subr.mxu0 0.0
    %1276 = vmatpush2.msra.mxu0 0.0
    %1277 = vmatprep.subr.mxu0 0.0
    %1278 = vmatpush2.msra.mxu0 0.0
    %1279 = vmatprep.subr.mxu0 0.0
    %1280 = vmatpush2.msra.mxu0 0.0
    %1281 = vmatprep.subr.mxu0 0.0
    %1282 = vmatpush2.msra.mxu0 0.0
    %1283 = vmatprep.subr.mxu0 0.0
    %1284 = vmatpush2.msra.mxu0 0.0
    %1285 = vmatprep.subr.mxu0 0.0
    %1286 = vmatpush2.msra.mxu0 0.0
    %1287 = vmatprep.subr.mxu0 0.0
    %1288 = vmatpush2.msra.mxu0 0.0
    %1289 = vmatprep.subr.mxu0 0.0
    %1290 = vmatpush2.msra.mxu0 0.0
    %1291 = vmatprep.subr.mxu0 0.0
    %1292 = vmatpush2.msra.mxu0 0.0
    %1293 = vmatprep.subr.mxu0 0.0
    %1294 = vmatpush2.msra.mxu0 0.0
    %1295 = vmatprep.subr.mxu0 0.0
    %1296 = vmatpush2.msra.mxu0 0.0
    %1297 = vmatprep.subr.mxu0 0.0
    %1298 = vmatpush2.msra.mxu0 0.0
    %1299 = vmatprep.subr.mxu0 0.0
    %1300 = vmatpush2.msra.mxu0 0.0
    %1301 = vmatprep.subr.mxu0 0.0
    %1302 = vmatpush2.msra.mxu0 0.0
    %1303 = vmatprep.mubr.f32.mxu0 0.0
    %1304 = vmatmul.mubr.f32.gmra.mxu0 %v1233
    %v1305 = vpop.f32.mrf.mxu0
    %v1306 = vadd.f32 0.0, %v1305
    %v1307 = vpop.f32.mrf.mxu0
    %v1308 = vadd.f32 0.0, %v1307
    %1309 = vdwg.mxu0
    %1310 = vmatprep.subr.mxu0 0.0
    %1311 = vmatpush1.msra.mxu0 %v344
    %1312 = vmatprep.subr.mxu0 0.0
    %1313 = vmatpush1.msra.mxu0 %v341
    %1314 = vmatprep.subr.mxu0 0.0
    %1315 = vmatpush1.msra.mxu0 %v338
    %1316 = vmatprep.subr.mxu0 0.0
    %1317 = vmatpush1.msra.mxu0 %v335
    %1318 = vmatprep.subr.mxu0 0.0
    %1319 = vmatpush1.msra.mxu0 %v332
    %1320 = vmatprep.subr.mxu0 0.0
    %1321 = vmatpush1.msra.mxu0 %v329
    %1322 = vmatprep.subr.mxu0 0.0
    %1323 = vmatpush1.msra.mxu0 %v326
    %1324 = vmatprep.subr.mxu0 0.0
    %1325 = vmatpush1.msra.mxu0 %v323
    %1326 = vmatprep.subr.mxu0 0.0
    %1327 = vmatpush1.msra.mxu0 %v320
    %1328 = vmatprep.subr.mxu0 0.0
    %1329 = vmatpush1.msra.mxu0 %v317
    %1330 = vmatprep.subr.mxu0 0.0
    %1331 = vmatpush1.msra.mxu0 %v314
    %1332 = vmatprep.subr.mxu0 0.0
    %1333 = vmatpush1.msra.mxu0 %v311
    %1334 = vmatprep.subr.mxu0 0.0
    %1335 = vmatpush1.msra.mxu0 %v308
    %1336 = vmatprep.subr.mxu0 0.0
    %1337 = vmatpush1.msra.mxu0 %v305
    %1338 = vmatprep.subr.mxu0 0.0
    %1339 = vmatpush1.msra.mxu0 %v302
    %1340 = vmatprep.subr.mxu0 0.0
    %1341 = vmatpush1.msra.mxu0 %v299
    %1342 = vmatprep.subr.mxu0 0.0
    %1343 = vmatpush2.msra.mxu0 0.0
    %1344 = vmatprep.subr.mxu0 0.0
    %1345 = vmatpush2.msra.mxu0 0.0
    %1346 = vmatprep.subr.mxu0 0.0
    %1347 = vmatpush2.msra.mxu0 0.0
    %1348 = vmatprep.subr.mxu0 0.0
    %1349 = vmatpush2.msra.mxu0 0.0
    %1350 = vmatprep.subr.mxu0 0.0
    %1351 = vmatpush2.msra.mxu0 0.0
    %1352 = vmatprep.subr.mxu0 0.0
    %1353 = vmatpush2.msra.mxu0 0.0
    %1354 = vmatprep.subr.mxu0 0.0
    %1355 = vmatpush2.msra.mxu0 0.0
    %1356 = vmatprep.subr.mxu0 0.0
    %1357 = vmatpush2.msra.mxu0 0.0
    %1358 = vmatprep.subr.mxu0 0.0
    %1359 = vmatpush2.msra.mxu0 0.0
    %1360 = vmatprep.subr.mxu0 0.0
    %1361 = vmatpush2.msra.mxu0 0.0
    %1362 = vmatprep.subr.mxu0 0.0
    %1363 = vmatpush2.msra.mxu0 0.0
    %1364 = vmatprep.subr.mxu0 0.0
    %1365 = vmatpush2.msra.mxu0 0.0
    %1366 = vmatprep.subr.mxu0 0.0
    %1367 = vmatpush2.msra.mxu0 0.0
    %1368 = vmatprep.subr.mxu0 0.0
    %1369 = vmatpush2.msra.mxu0 0.0
    %1370 = vmatprep.subr.mxu0 0.0
    %1371 = vmatpush2.msra.mxu0 0.0
    %1372 = vmatprep.subr.mxu0 0.0
    %1373 = vmatpush2.msra.mxu0 0.0
    %1374 = vmatprep.mubr.f32.mxu0 0.0
    %1375 = vmatmul.mubr.f32.gmra.mxu0 %v1233
    %v1376 = vpop.f32.mrf.mxu0
    %v1377 = vadd.f32 0.0, %v1376
    %v1378 = vpop.f32.mrf.mxu0
    %1379 = vdwg.mxu0
    %v1381 = vrot.slane %v1306, 6
    %v1383 = vadd.f32 %v1236, %v1381
    %v1384 = vxor.u32 %v1383, 2147483648
    %v1385 = vmul.f32 %v1384, 1.442695
    %v1386 = vpow.pop %v1385
    %v1387 = vadd.f32 %v1386, 1.0
    %v1388 = vrcp.pop %v1387
    %v1389 = vmul.f32 1.0, %v1388
    %v1391 = vrot.slane %v1308, 6
    %v1393 = vadd.f32 %v1237, %v1391
    %v1394 = vxor.u32 %v1393, 2147483648
    %v1395 = vmul.f32 %v1394, 1.442695
    %v1396 = vpow.pop %v1395
    %v1397 = vadd.f32 %v1396, 1.0
    %v1398 = vrcp.pop %v1397
    %v1399 = vmul.f32 1.0, %v1398
    %v1400 = vadd.f32 %v1377, %v509
    %v1402 = vrot.slane %v1400, 6
    %v1404 = vmul.f32 %v1389, %v1402
    %v1405 = vadd.f32 %v1238, %v1404
    %v1406 = vtanh.pop %v1405
    %v1407 = vsub.f32 1.0, %v1399
    %v1408 = vmul.f32 %v1407, %v1406
    %v1410 = vrot.slane %v1233, 6
    %v1412 = vmul.f32 %v1399, %v1410
    %v1413 = vadd.f32 %v1408, %v1412
    %1414 = vst [vmem:[#allocation3 + $0x3] sm:$0x4] %v1413
    %1415 = vst [vmem:[#allocation3 + $0xa] sm:$0x8] %v1413
    %v1416 = vld [vmem:[#allocation2 + $0x18] sm:$0x30]
    %v1417 = vld [vmem:[#allocation2 + $0x20] sm:$0x30]
    %v1418 = vld [vmem:[#allocation2 + $0x28] sm:$0x30]
    %v1420 = vrot.slane %v1413, 2
    %1422 = vmatprep.subr.mxu0 %v343
    %1423 = vmatpush1.msra.mxu0 %v342
    %1424 = vmatprep.subr.mxu0 %v340
    %1425 = vmatpush1.msra.mxu0 %v339
    %1426 = vmatprep.subr.mxu0 %v337
    %1427 = vmatpush1.msra.mxu0 %v336
    %1428 = vmatprep.subr.mxu0 %v334
    %1429 = vmatpush1.msra.mxu0 %v333
    %1430 = vmatprep.subr.mxu0 %v331
    %1431 = vmatpush1.msra.mxu0 %v330
    %1432 = vmatprep.subr.mxu0 %v328
    %1433 = vmatpush1.msra.mxu0 %v327
    %1434 = vmatprep.subr.mxu0 %v325
    %1435 = vmatpush1.msra.mxu0 %v324
    %1436 = vmatprep.subr.mxu0 %v322
    %1437 = vmatpush1.msra.mxu0 %v321
    %1438 = vmatprep.subr.mxu0 %v319
    %1439 = vmatpush1.msra.mxu0 %v318
    %1440 = vmatprep.subr.mxu0 %v316
    %1441 = vmatpush1.msra.mxu0 %v315
    %1442 = vmatprep.subr.mxu0 %v313
    %1443 = vmatpush1.msra.mxu0 %v312
    %1444 = vmatprep.subr.mxu0 %v310
    %1445 = vmatpush1.msra.mxu0 %v309
    %1446 = vmatprep.subr.mxu0 %v307
    %1447 = vmatpush1.msra.mxu0 %v306
    %1448 = vmatprep.subr.mxu0 %v304
    %1449 = vmatpush1.msra.mxu0 %v303
    %1450 = vmatprep.subr.mxu0 %v301
    %1451 = vmatpush1.msra.mxu0 %v300
    %1452 = vmatprep.subr.mxu0 %v298
    %1453 = vmatpush1.msra.mxu0 %v297
    %1454 = vmatprep.subr.mxu0 0.0
    %1455 = vmatpush2.msra.mxu0 0.0
    %1456 = vmatprep.subr.mxu0 0.0
    %1457 = vmatpush2.msra.mxu0 0.0
    %1458 = vmatprep.subr.mxu0 0.0
    %1459 = vmatpush2.msra.mxu0 0.0
    %1460 = vmatprep.subr.mxu0 0.0
    %1461 = vmatpush2.msra.mxu0 0.0
    %1462 = vmatprep.subr.mxu0 0.0
    %1463 = vmatpush2.msra.mxu0 0.0
    %1464 = vmatprep.subr.mxu0 0.0
    %1465 = vmatpush2.msra.mxu0 0.0
    %1466 = vmatprep.subr.mxu0 0.0
    %1467 = vmatpush2.msra.mxu0 0.0
    %1468 = vmatprep.subr.mxu0 0.0
    %1469 = vmatpush2.msra.mxu0 0.0
    %1470 = vmatprep.subr.mxu0 0.0
    %1471 = vmatpush2.msra.mxu0 0.0
    %1472 = vmatprep.subr.mxu0 0.0
    %1473 = vmatpush2.msra.mxu0 0.0
    %1474 = vmatprep.subr.mxu0 0.0
    %1475 = vmatpush2.msra.mxu0 0.0
    %1476 = vmatprep.subr.mxu0 0.0
    %1477 = vmatpush2.msra.mxu0 0.0
    %1478 = vmatprep.subr.mxu0 0.0
    %1479 = vmatpush2.msra.mxu0 0.0
    %1480 = vmatprep.subr.mxu0 0.0
    %1481 = vmatpush2.msra.mxu0 0.0
    %1482 = vmatprep.subr.mxu0 0.0
    %1483 = vmatpush2.msra.mxu0 0.0
    %1484 = vmatprep.subr.mxu0 0.0
    %1485 = vmatpush2.msra.mxu0 0.0
    %1486 = vmatprep.mubr.f32.mxu0 0.0
    %1487 = vmatmul.mubr.f32.gmra.mxu0 %v1420
    %v1488 = vpop.f32.mrf.mxu0
    %v1489 = vadd.f32 0.0, %v1488
    %v1490 = vpop.f32.mrf.mxu0
    %v1491 = vadd.f32 0.0, %v1490
    %1492 = vdwg.mxu0
    %1493 = vmatprep.subr.mxu0 0.0
    %1494 = vmatpush1.msra.mxu0 %v344
    %1495 = vmatprep.subr.mxu0 0.0
    %1496 = vmatpush1.msra.mxu0 %v341
    %1497 = vmatprep.subr.mxu0 0.0
    %1498 = vmatpush1.msra.mxu0 %v338
    %1499 = vmatprep.subr.mxu0 0.0
    %1500 = vmatpush1.msra.mxu0 %v335
    %1501 = vmatprep.subr.mxu0 0.0
    %1502 = vmatpush1.msra.mxu0 %v332
    %1503 = vmatprep.subr.mxu0 0.0
    %1504 = vmatpush1.msra.mxu0 %v329
    %1505 = vmatprep.subr.mxu0 0.0
    %1506 = vmatpush1.msra.mxu0 %v326
    %1507 = vmatprep.subr.mxu0 0.0
    %1508 = vmatpush1.msra.mxu0 %v323
    %1509 = vmatprep.subr.mxu0 0.0
    %1510 = vmatpush1.msra.mxu0 %v320
    %1511 = vmatprep.subr.mxu0 0.0
    %1512 = vmatpush1.msra.mxu0 %v317
    %1513 = vmatprep.subr.mxu0 0.0
    %1514 = vmatpush1.msra.mxu0 %v314
    %1515 = vmatprep.subr.mxu0 0.0
    %1516 = vmatpush1.msra.mxu0 %v311
    %1517 = vmatprep.subr.mxu0 0.0
    %1518 = vmatpush1.msra.mxu0 %v308
    %1519 = vmatprep.subr.mxu0 0.0
    %1520 = vmatpush1.msra.mxu0 %v305
    %1521 = vmatprep.subr.mxu0 0.0
    %1522 = vmatpush1.msra.mxu0 %v302
    %1523 = vmatprep.subr.mxu0 0.0
    %1524 = vmatpush1.msra.mxu0 %v299
    %1525 = vmatprep.subr.mxu0 0.0
    %1526 = vmatpush2.msra.mxu0 0.0
    %1527 = vmatprep.subr.mxu0 0.0
    %1528 = vmatpush2.msra.mxu0 0.0
    %1529 = vmatprep.subr.mxu0 0.0
    %1530 = vmatpush2.msra.mxu0 0.0
    %1531 = vmatprep.subr.mxu0 0.0
    %1532 = vmatpush2.msra.mxu0 0.0
    %1533 = vmatprep.subr.mxu0 0.0
    %1534 = vmatpush2.msra.mxu0 0.0
    %1535 = vmatprep.subr.mxu0 0.0
    %1536 = vmatpush2.msra.mxu0 0.0
    %1537 = vmatprep.subr.mxu0 0.0
    %1538 = vmatpush2.msra.mxu0 0.0
    %1539 = vmatprep.subr.mxu0 0.0
    %1540 = vmatpush2.msra.mxu0 0.0
    %1541 = vmatprep.subr.mxu0 0.0
    %1542 = vmatpush2.msra.mxu0 0.0
    %1543 = vmatprep.subr.mxu0 0.0
    %1544 = vmatpush2.msra.mxu0 0.0
    %1545 = vmatprep.subr.mxu0 0.0
    %1546 = vmatpush2.msra.mxu0 0.0
    %1547 = vmatprep.subr.mxu0 0.0
    %1548 = vmatpush2.msra.mxu0 0.0
    %1549 = vmatprep.subr.mxu0 0.0
    %1550 = vmatpush2.msra.mxu0 0.0
    %1551 = vmatprep.subr.mxu0 0.0
    %1552 = vmatpush2.msra.mxu0 0.0
    %1553 = vmatprep.subr.mxu0 0.0
    %1554 = vmatpush2.msra.mxu0 0.0
    %1555 = vmatprep.subr.mxu0 0.0
    %1556 = vmatpush2.msra.mxu0 0.0
    %1557 = vmatprep.mubr.f32.mxu0 0.0
    %1558 = vmatmul.mubr.f32.gmra.mxu0 %v1420
    %v1559 = vpop.f32.mrf.mxu0
    %v1560 = vadd.f32 0.0, %v1559
    %v1561 = vpop.f32.mrf.mxu0
    %1562 = vdwg.mxu0
    %v1564 = vrot.slane %v1489, 4
    %v1566 = vadd.f32 %v1416, %v1564
    %v1567 = vxor.u32 %v1566, 2147483648
    %v1568 = vmul.f32 %v1567, 1.442695
    %v1569 = vpow.pop %v1568
    %v1570 = vadd.f32 %v1569, 1.0
    %v1571 = vrcp.pop %v1570
    %v1572 = vmul.f32 1.0, %v1571
    %v1574 = vrot.slane %v1491, 4
    %v1576 = vadd.f32 %v1417, %v1574
    %v1577 = vxor.u32 %v1576, 2147483648
    %v1578 = vmul.f32 %v1577, 1.442695
    %v1579 = vpow.pop %v1578
    %v1580 = vadd.f32 %v1579, 1.0
    %v1581 = vrcp.pop %v1580
    %v1582 = vmul.f32 1.0, %v1581
    %v1583 = vadd.f32 %v1560, %v509
    %v1585 = vrot.slane %v1583, 4
    %v1587 = vmul.f32 %v1572, %v1585
    %v1588 = vadd.f32 %v1418, %v1587
    %v1589 = vtanh.pop %v1588
    %v1590 = vsub.f32 1.0, %v1582
    %v1591 = vmul.f32 %v1590, %v1589
    %v1592 = vrot.slane %v1413, 6
    %v1594 = vmul.f32 %v1582, %v1592
    %v1595 = vadd.f32 %v1591, %v1594
    %1596 = vst [vmem:[#allocation3 + $0x2] sm:$0x10] %v1595
    %1597 = vst [vmem:[#allocation3 + $0x9] sm:$0x20] %v1595
    %v1598 = vld [vmem:[#allocation2 + $0x18] sm:$0xc0]
    %v1599 = vld [vmem:[#allocation2 + $0x20] sm:$0xc0]
    %v1600 = vld [vmem:[#allocation2 + $0x28] sm:$0xc0]
    %v1602 = vrot.slane %v1595, 4
    %1604 = vmatprep.subr.mxu0 %v343
    %1605 = vmatpush1.msra.mxu0 %v342
    %1606 = vmatprep.subr.mxu0 %v340
    %1607 = vmatpush1.msra.mxu0 %v339
    %1608 = vmatprep.subr.mxu0 %v337
    %1609 = vmatpush1.msra.mxu0 %v336
    %1610 = vmatprep.subr.mxu0 %v334
    %1611 = vmatpush1.msra.mxu0 %v333
    %1612 = vmatprep.subr.mxu0 %v331
    %1613 = vmatpush1.msra.mxu0 %v330
    %1614 = vmatprep.subr.mxu0 %v328
    %1615 = vmatpush1.msra.mxu0 %v327
    %1616 = vmatprep.subr.mxu0 %v325
    %1617 = vmatpush1.msra.mxu0 %v324
    %1618 = vmatprep.subr.mxu0 %v322
    %1619 = vmatpush1.msra.mxu0 %v321
    %1620 = vmatprep.subr.mxu0 %v319
    %1621 = vmatpush1.msra.mxu0 %v318
    %1622 = vmatprep.subr.mxu0 %v316
    %1623 = vmatpush1.msra.mxu0 %v315
    %1624 = vmatprep.subr.mxu0 %v313
    %1625 = vmatpush1.msra.mxu0 %v312
    %1626 = vmatprep.subr.mxu0 %v310
    %1627 = vmatpush1.msra.mxu0 %v309
    %1628 = vmatprep.subr.mxu0 %v307
    %1629 = vmatpush1.msra.mxu0 %v306
    %1630 = vmatprep.subr.mxu0 %v304
    %1631 = vmatpush1.msra.mxu0 %v303
    %1632 = vmatprep.subr.mxu0 %v301
    %1633 = vmatpush1.msra.mxu0 %v300
    %1634 = vmatprep.subr.mxu0 %v298
    %1635 = vmatpush1.msra.mxu0 %v297
    %1636 = vmatprep.subr.mxu0 0.0
    %1637 = vmatpush2.msra.mxu0 0.0
    %1638 = vmatprep.subr.mxu0 0.0
    %1639 = vmatpush2.msra.mxu0 0.0
    %1640 = vmatprep.subr.mxu0 0.0
    %1641 = vmatpush2.msra.mxu0 0.0
    %1642 = vmatprep.subr.mxu0 0.0
    %1643 = vmatpush2.msra.mxu0 0.0
    %1644 = vmatprep.subr.mxu0 0.0
    %1645 = vmatpush2.msra.mxu0 0.0
    %1646 = vmatprep.subr.mxu0 0.0
    %1647 = vmatpush2.msra.mxu0 0.0
    %1648 = vmatprep.subr.mxu0 0.0
    %1649 = vmatpush2.msra.mxu0 0.0
    %1650 = vmatprep.subr.mxu0 0.0
    %1651 = vmatpush2.msra.mxu0 0.0
    %1652 = vmatprep.subr.mxu0 0.0
    %1653 = vmatpush2.msra.mxu0 0.0
    %1654 = vmatprep.subr.mxu0 0.0
    %1655 = vmatpush2.msra.mxu0 0.0
    %1656 = vmatprep.subr.mxu0 0.0
    %1657 = vmatpush2.msra.mxu0 0.0
    %1658 = vmatprep.subr.mxu0 0.0
    %1659 = vmatpush2.msra.mxu0 0.0
    %1660 = vmatprep.subr.mxu0 0.0
    %1661 = vmatpush2.msra.mxu0 0.0
    %1662 = vmatprep.subr.mxu0 0.0
    %1663 = vmatpush2.msra.mxu0 0.0
    %1664 = vmatprep.subr.mxu0 0.0
    %1665 = vmatpush2.msra.mxu0 0.0
    %1666 = vmatprep.subr.mxu0 0.0
    %1667 = vmatpush2.msra.mxu0 0.0
    %1668 = vmatprep.mubr.f32.mxu0 0.0
    %1669 = vmatmul.mubr.f32.gmra.mxu0 %v1602
    %v1670 = vpop.f32.mrf.mxu0
    %v1671 = vadd.f32 0.0, %v1670
    %v1672 = vpop.f32.mrf.mxu0
    %v1673 = vadd.f32 0.0, %v1672
    %1674 = vdwg.mxu0
    %1675 = vmatprep.subr.mxu0 0.0
    %1676 = vmatpush1.msra.mxu0 %v344
    %1677 = vmatprep.subr.mxu0 0.0
    %1678 = vmatpush1.msra.mxu0 %v341
    %1679 = vmatprep.subr.mxu0 0.0
    %1680 = vmatpush1.msra.mxu0 %v338
    %1681 = vmatprep.subr.mxu0 0.0
    %1682 = vmatpush1.msra.mxu0 %v335
    %1683 = vmatprep.subr.mxu0 0.0
    %1684 = vmatpush1.msra.mxu0 %v332
    %1685 = vmatprep.subr.mxu0 0.0
    %1686 = vmatpush1.msra.mxu0 %v329
    %1687 = vmatprep.subr.mxu0 0.0
    %1688 = vmatpush1.msra.mxu0 %v326
    %1689 = vmatprep.subr.mxu0 0.0
    %1690 = vmatpush1.msra.mxu0 %v323
    %1691 = vmatprep.subr.mxu0 0.0
    %1692 = vmatpush1.msra.mxu0 %v320
    %1693 = vmatprep.subr.mxu0 0.0
    %1694 = vmatpush1.msra.mxu0 %v317
    %1695 = vmatprep.subr.mxu0 0.0
    %1696 = vmatpush1.msra.mxu0 %v314
    %1697 = vmatprep.subr.mxu0 0.0
    %1698 = vmatpush1.msra.mxu0 %v311
    %1699 = vmatprep.subr.mxu0 0.0
    %1700 = vmatpush1.msra.mxu0 %v308
    %1701 = vmatprep.subr.mxu0 0.0
    %1702 = vmatpush1.msra.mxu0 %v305
    %1703 = vmatprep.subr.mxu0 0.0
    %1704 = vmatpush1.msra.mxu0 %v302
    %1705 = vmatprep.subr.mxu0 0.0
    %1706 = vmatpush1.msra.mxu0 %v299
    %1707 = vmatprep.subr.mxu0 0.0
    %1708 = vmatpush2.msra.mxu0 0.0
    %1709 = vmatprep.subr.mxu0 0.0
    %1710 = vmatpush2.msra.mxu0 0.0
    %1711 = vmatprep.subr.mxu0 0.0
    %1712 = vmatpush2.msra.mxu0 0.0
    %1713 = vmatprep.subr.mxu0 0.0
    %1714 = vmatpush2.msra.mxu0 0.0
    %1715 = vmatprep.subr.mxu0 0.0
    %1716 = vmatpush2.msra.mxu0 0.0
    %1717 = vmatprep.subr.mxu0 0.0
    %1718 = vmatpush2.msra.mxu0 0.0
    %1719 = vmatprep.subr.mxu0 0.0
    %1720 = vmatpush2.msra.mxu0 0.0
    %1721 = vmatprep.subr.mxu0 0.0
    %1722 = vmatpush2.msra.mxu0 0.0
    %1723 = vmatprep.subr.mxu0 0.0
    %1724 = vmatpush2.msra.mxu0 0.0
    %1725 = vmatprep.subr.mxu0 0.0
    %1726 = vmatpush2.msra.mxu0 0.0
    %1727 = vmatprep.subr.mxu0 0.0
    %1728 = vmatpush2.msra.mxu0 0.0
    %1729 = vmatprep.subr.mxu0 0.0
    %1730 = vmatpush2.msra.mxu0 0.0
    %1731 = vmatprep.subr.mxu0 0.0
    %1732 = vmatpush2.msra.mxu0 0.0
    %1733 = vmatprep.subr.mxu0 0.0
    %1734 = vmatpush2.msra.mxu0 0.0
    %1735 = vmatprep.subr.mxu0 0.0
    %1736 = vmatpush2.msra.mxu0 0.0
    %1737 = vmatprep.subr.mxu0 0.0
    %1738 = vmatpush2.msra.mxu0 0.0
    %1739 = vmatprep.mubr.f32.mxu0 0.0
    %1740 = vmatmul.mubr.f32.gmra.mxu0 %v1602
    %v1741 = vpop.f32.mrf.mxu0
    %v1742 = vadd.f32 0.0, %v1741
    %v1743 = vpop.f32.mrf.mxu0
    %1744 = vdwg.mxu0
    %v1746 = vrot.slane %v1671, 2
    %v1748 = vadd.f32 %v1598, %v1746
    %v1749 = vxor.u32 %v1748, 2147483648
    %v1750 = vmul.f32 %v1749, 1.442695
    %v1751 = vpow.pop %v1750
    %v1752 = vadd.f32 %v1751, 1.0
    %v1753 = vrcp.pop %v1752
    %v1754 = vmul.f32 1.0, %v1753
    %v1756 = vrot.slane %v1673, 2
    %v1758 = vadd.f32 %v1599, %v1756
    %v1759 = vxor.u32 %v1758, 2147483648
    %v1760 = vmul.f32 %v1759, 1.442695
    %v1761 = vpow.pop %v1760
    %v1762 = vadd.f32 %v1761, 1.0
    %v1763 = vrcp.pop %v1762
    %v1764 = vmul.f32 1.0, %v1763
    %v1765 = vadd.f32 %v1742, %v509
    %v1767 = vrot.slane %v1765, 2
    %v1769 = vmul.f32 %v1754, %v1767
    %v1770 = vadd.f32 %v1600, %v1769
    %v1771 = vtanh.pop %v1770
    %v1772 = vsub.f32 1.0, %v1764
    %v1773 = vmul.f32 %v1772, %v1771
    %v1774 = vrot.slane %v1595, 6
    %v1776 = vmul.f32 %v1764, %v1774
    %v1777 = vadd.f32 %v1773, %v1776
    %1778 = vst [vmem:[#allocation3 + $0x1] sm:$0x40] %v1777
    %1779 = vst [vmem:[#allocation3 + $0x8] sm:$0x80] %v1777
    %1780 = vst [vmem:[#allocation14 - $0x6] sm:$0xc0] %v1777
    %v1781 = vld [vmem:[#allocation3] sm:$0xff]
    %v1782 = vld [vmem:[#allocation3 + $0x8] sm:$0xff]
    %v1783 = vld [vmem:[#allocation12] sm:$0xff]
    %v1784 = vld [vmem:[#allocation12 + $0x8] sm:$0xff]
    %v1785 = vld [vmem:[#allocation12 + $0x10] sm:$0xff]
    %v1786 = vld [vmem:[#allocation12 + $0x18] sm:$0xff]
    %v1787 = vld [vmem:[#allocation12 + $0x20] sm:$0xff]
    %v1788 = vld [vmem:[#allocation12 + $0x28] sm:$0xff]
    %v1789 = vld [vmem:[#allocation12 + $0x30] sm:$0xff]
    %v1790 = vld [vmem:[#allocation12 + $0x38] sm:$0xff]
    %v1791 = vld [vmem:[#allocation12 + $0x40] sm:$0xff]
    %v1792 = vld [vmem:[#allocation12 + $0x48] sm:$0xff]
    %v1793 = vld [vmem:[#allocation12 + $0x50] sm:$0xff]
    %v1794 = vld [vmem:[#allocation12 + $0x58] sm:$0xff]
    %v1795 = vld [vmem:[#allocation12 + $0x60] sm:$0xff]
    %v1796 = vld [vmem:[#allocation12 + $0x68] sm:$0xff]
    %v1797 = vld [vmem:[#allocation12 + $0x70] sm:$0xff]
    %v1798 = vld [vmem:[#allocation12 + $0x78] sm:$0xff]
    %v1799 = vld [vmem:[%s7] sm:$0x1]
    %v1801 = vlaneseq
    %v1802 = vshrl.u32 %v1801, 7
    %v1803 = vsub.s32 0, %v1802
    %v1804 = vrot.slane %v1799, %v1803
    %1806 = vmatprep.subr.mxu0 0.0
    %1807 = vmatpush1.msra.mxu0 %v1798
    %1808 = vmatprep.subr.mxu0 0.0
    %1809 = vmatpush1.msra.mxu0 %v1797
    %1810 = vmatprep.subr.mxu0 0.0
    %1811 = vmatpush1.msra.mxu0 %v1796
    %1812 = vmatprep.subr.mxu0 0.0
    %1813 = vmatpush1.msra.mxu0 %v1795
    %1814 = vmatprep.subr.mxu0 0.0
    %1815 = vmatpush1.msra.mxu0 %v1794
    %1816 = vmatprep.subr.mxu0 0.0
    %1817 = vmatpush1.msra.mxu0 %v1793
    %1818 = vmatprep.subr.mxu0 0.0
    %1819 = vmatpush1.msra.mxu0 %v1792
    %1820 = vmatprep.subr.mxu0 0.0
    %1821 = vmatpush1.msra.mxu0 %v1791
    %1822 = vmatprep.subr.mxu0 0.0
    %1823 = vmatpush1.msra.mxu0 %v1790
    %1824 = vmatprep.subr.mxu0 0.0
    %1825 = vmatpush1.msra.mxu0 %v1789
    %1826 = vmatprep.subr.mxu0 0.0
    %1827 = vmatpush1.msra.mxu0 %v1788
    %1828 = vmatprep.subr.mxu0 0.0
    %1829 = vmatpush1.msra.mxu0 %v1787
    %1830 = vmatprep.subr.mxu0 0.0
    %1831 = vmatpush1.msra.mxu0 %v1786
    %1832 = vmatprep.subr.mxu0 0.0
    %1833 = vmatpush1.msra.mxu0 %v1785
    %1834 = vmatprep.subr.mxu0 0.0
    %1835 = vmatpush1.msra.mxu0 %v1784
    %1836 = vmatprep.subr.mxu0 0.0
    %1837 = vmatpush1.msra.mxu0 %v1783
    %1838 = vmatprep.subr.mxu0 0.0
    %1839 = vmatpush2.msra.mxu0 0.0
    %1840 = vmatprep.subr.mxu0 0.0
    %1841 = vmatpush2.msra.mxu0 0.0
    %1842 = vmatprep.subr.mxu0 0.0
    %1843 = vmatpush2.msra.mxu0 0.0
    %1844 = vmatprep.subr.mxu0 0.0
    %1845 = vmatpush2.msra.mxu0 0.0
    %1846 = vmatprep.subr.mxu0 0.0
    %1847 = vmatpush2.msra.mxu0 0.0
    %1848 = vmatprep.subr.mxu0 0.0
    %1849 = vmatpush2.msra.mxu0 0.0
    %1850 = vmatprep.subr.mxu0 0.0
    %1851 = vmatpush2.msra.mxu0 0.0
    %1852 = vmatprep.subr.mxu0 0.0
    %1853 = vmatpush2.msra.mxu0 0.0
    %1854 = vmatprep.subr.mxu0 0.0
    %1855 = vmatpush2.msra.mxu0 0.0
    %1856 = vmatprep.subr.mxu0 0.0
    %1857 = vmatpush2.msra.mxu0 0.0
    %1858 = vmatprep.subr.mxu0 0.0
    %1859 = vmatpush2.msra.mxu0 0.0
    %1860 = vmatprep.subr.mxu0 0.0
    %1861 = vmatpush2.msra.mxu0 0.0
    %1862 = vmatprep.subr.mxu0 0.0
    %1863 = vmatpush2.msra.mxu0 0.0
    %1864 = vmatprep.subr.mxu0 0.0
    %1865 = vmatpush2.msra.mxu0 0.0
    %1866 = vmatprep.subr.mxu0 0.0
    %1867 = vmatpush2.msra.mxu0 0.0
    %1868 = vmatprep.subr.mxu0 0.0
    %1869 = vmatpush2.msra.mxu0 0.0
    %1870 = vmatprep.mubr.f32.mxu0 0.0
    %1871 = vmatmul.mubr.f32.gmra.mxu0 %v1781
    %v1872 = vpop.f32.mrf.mxu0
    %v1873 = vadd.f32 %v1804, %v1872
    %v1874 = vpop.f32.mrf.mxu0
    %1875 = vmatprep.mubr.f32.mxu0 0.0
    %1876 = vmatmul.mubr.f32.gmra.mxu0 %v1782
    %v1877 = vpop.f32.mrf.mxu0
    %v1878 = vadd.f32 %v1804, %v1877
    %v1879 = vpop.f32.mrf.mxu0
    %1880 = vdwg.mxu0
    %1881 = vmax.xlane.f32.xlu0 %v1873
    %v1882 = vpop.xlane.xlu0 %1881
    %1883 = vmax.xlane.f32.xlu0 %v1878
    %v1884 = vpop.xlane.xlu0 %1883
    %v1885 = vsub.f32 %v1873, %v1882
    %v1886 = vsub.f32 %v1878, %v1884
    %v1887 = vmul.f32 %v1885, 1.442695
    %v1888 = vpow.pop %v1887
    %v1889 = vmul.f32 %v1886, 1.442695
    %v1890 = vpow.pop %v1889
    %1891 = vadd.xlane.f32.xlu0 %v1888
    %v1892 = vpop.xlane.xlu0 %1891
    %1893 = vadd.xlane.f32.xlu0 %v1890
    %v1894 = vpop.xlane.xlu0 %1893
    %v1895 = vlog2.pop %v1892
    %v1896 = vmul.f32 %v1895, 0.6931472
    %v1897 = vlog2.pop %v1894
    %v1898 = vmul.f32 %v1897, 0.6931472
    %v1899 = vsub.f32 %v1885, %v1896
    %v1900 = vsub.f32 %v1886, %v1898
    %1901 = vst [vmem:[#allocation13] sm:$0xff] %v1899
    %s1902 = scalar_lea.vmem [#allocation13], 8
    %1903 = vst [vmem:[%s1902] sm:$0xff] %v1900
    // Predicated region
    $region54: #{tpu_custom_call.1} parent=1 // pred_check
      _
    $region55: #{tpu_custom_call.1} parent=1 // pred_check_branch
      %1905 = sbr.rel (0) target = $region57
    $region56: #{tpu_custom_call.1} parent=1 // pred_region
      %s1907 = ssub.s32 256, 256
      %1908 = vsyncadd [#allocation6], %s1907
      %s1909 = sshll.u32 [#allocation13], 4
      %s1910 = int_to_ptr.vmem [resolvable:$true] %s1909
      %1915 = dma.vmem_to_hbm [thread:$0]  %s1910, 256, %s8, [#allocation6], 128, 128, 8
    $region57: #{tpu_custom_call.1} parent=1 // pred_fallthru
      _
    // Predicated region
    $region58: #{tpu_custom_call.1} parent=1 // pred_check
      _
    $region59: #{tpu_custom_call.1} parent=1 // pred_check_branch
      %1917 = sbr.rel (0) target = $region61
    $region60: #{tpu_custom_call.1} parent=1 // pred_region
      %s1919 = ssub.s32 32, 32
      %1920 = vsyncadd [#allocation15], %s1919
      %s1922 = sshll.u32 [#allocation14], 4
      %s1923 = int_to_ptr.vmem [resolvable:$true] %s1922
      %1925 = dma.vmem_to_hbm [thread:$0]  %s1923, 32, %s9, [#allocation15]
    $region61: #{tpu_custom_call.1} parent=1 // pred_fallthru
      _
    // Predicated region
    $region62: #{tpu_custom_call.1} parent=1 // pred_check
      _
    $region63: #{tpu_custom_call.1} parent=1 // pred_check_branch
      %1927 = sbr.rel (0) target = $region65
    $region64: #{tpu_custom_call.1} parent=1 // pred_region
      %1928 = dma.done [#allocation6], 256
    $region65: #{tpu_custom_call.1} parent=1 // pred_fallthru
      _
    // Predicated region
    $region66: #{tpu_custom_call.1} parent=1 // pred_check
      _
    $region67: #{tpu_custom_call.1} parent=1 // pred_check_branch
      %1930 = sbr.rel (0) target = $region69
    $region68: #{tpu_custom_call.1} parent=1 // pred_region
      %1931 = dma.done [#allocation15], 32
    $region69: #{tpu_custom_call.1} parent=1 // pred_fallthru
      _
    %1932 = vsyncpa [#allocation5], 1
    %1933 = vsyncpa [#allocation8], 1
    %1934 = vsyncpa [#allocation11], 1
    %1935 = vsyncpa [#allocation6], 1
    %1936 = vsyncpa [#allocation15], 1

</llo_original>
